<compile_context>
chip_gen: v5e
topology: v5e:2x2
jax: 0.10.0
libtpu: 0.0.40
codegen_flags: <defaults>
</compile_context>

<pallas_src>
import functools

import jax
import jax.numpy as jnp
from jax.experimental import pallas as pl
from jax.experimental.pallas import tpu as pltpu

_LANE = 128
_SUBLANE = 8


def _round_up(x, m):
    return (x + m - 1) // m * m


def _pca_kernel(x_ref, w_ref, b_ref, o_ref):
    # x_ref: (Bp, Dp) f32 VMEM   w_ref: (Dp, Np) bf16 VMEM (PyTorch weight.T, padded)
    # b_ref: (1, Np)  f32 VMEM   o_ref: (Bp, Np) f32 VMEM
    x = x_ref[...].astype(w_ref.dtype)  # tiny VPU cast; MXU runs native bf16
    acc = jnp.dot(x, w_ref[...], preferred_element_type=jnp.float32)
    o_ref[...] = (acc + b_ref[...]).astype(o_ref.dtype)


def init_pca_params(weight_nd, bias_n, *, param_dtype=jnp.bfloat16):
    """One-time parameter prep (model load): transpose + zero-pad + cast.

    weight_nd: (N, D) float32 -- PyTorch nn.Linear.weight layout.
    bias_n:    (N,)   float32
    Returns (weight_dn_padded, bias_padded_2d, N).
    """
    N, D = weight_nd.shape
    Dp, Np = _round_up(D, _LANE), _round_up(N, _LANE)
    w_dn = jnp.asarray(weight_nd).T.astype(param_dtype)     # (D, N), transposed once
    w_dn = jnp.pad(w_dn, ((0, Dp - D), (0, Np - N)))         # zero-pad: exact math
    b2d = jnp.pad(jnp.asarray(bias_n, jnp.float32), (0, Np - N)).reshape(1, Np)
    return w_dn, b2d, N


@functools.partial(jax.jit, static_argnames=("num_out",))
def pca_forward(x, w_dn, b2d, *, num_out):
    """PCAModule.forward: (B, D) -> (B, num_out)."""
    B, D = x.shape
    Dp, Np = w_dn.shape
    Bp = _round_up(max(B, 1), _SUBLANE)
    x_pad = jnp.pad(x.astype(jnp.float32), ((0, Bp - B), (0, Dp - D)))

    vmem = pltpu.MemorySpace.VMEM
    out = pl.pallas_call(
        _pca_kernel,
        out_shape=jax.ShapeDtypeStruct((Bp, Np), jnp.float32),
        in_specs=[
            pl.BlockSpec((Bp, Dp), lambda: (0, 0), memory_space=vmem),
            pl.BlockSpec((Dp, Np), lambda: (0, 0), memory_space=vmem),
            pl.BlockSpec((1, Np), lambda: (0, 0), memory_space=vmem),
        ],
        out_specs=pl.BlockSpec((Bp, Np), lambda: (0, 0), memory_space=vmem),
    )(x_pad, w_dn, b2d)
    return out[:B, :num_out]


if __name__ == "__main__":
    # Module-implied dims: pca_input_dim = pca_output_dim = 768; small batch.
    B, D, N = 2, 768, 768

    key = jax.random.PRNGKey(0)
    k_x, k_w, k_b = jax.random.split(key, 3)

    # nn.Linear default init: U(-1/sqrt(D), 1/sqrt(D)).
    bound = 1.0 / (D ** 0.5)
    x = jax.random.normal(k_x, (B, D), dtype=jnp.float32)
    weight = jax.random.uniform(k_w, (N, D), minval=-bound, maxval=bound,
                                dtype=jnp.float32)  # PyTorch layout (N, D)
    bias = jax.random.uniform(k_b, (N,), minval=-bound, maxval=bound,
                              dtype=jnp.float32)

    # One-time parameter prep (transpose + pad + bf16 cast), then the hot-path call.
    w_dn, b2d, n_out = init_pca_params(weight, bias)
    out = pca_forward(x, w_dn, b2d, num_out=n_out)
    out = jax.block_until_ready(out)

    assert out.shape == (B, N)

    # Tight check: same bf16-rounded operands, f32 accumulate (matches kernel math).
    w_r = w_dn[:D, :N].astype(jnp.float32)
    x_r = x.astype(jnp.bfloat16).astype(jnp.float32)
    ref_rounded = x_r @ w_r + bias
    assert jnp.allclose(out, ref_rounded, atol=1e-3, rtol=1e-3)

    # Semantic check vs. full-precision PyTorch forward (bf16 weight rounding ~0.4%).
    ref_f32 = x @ weight.T + bias
    assert jnp.allclose(out, ref_f32, atol=5e-2, rtol=5e-2)

    print("KERNEL_OK")
</pallas_src>

<mosaic_0001>
module attributes {stable_mosaic.version = 11 : i64} {
  func.func @_pca_kernel(%arg0: memref<8x768xf32, #tpu.memory_space<vmem>>, %arg1: memref<768x768xbf16, #tpu.memory_space<vmem>>, %arg2: memref<1x768xf32, #tpu.memory_space<vmem>>, %arg3: memref<8x768xf32, #tpu.memory_space<vmem>>) attributes {dimension_semantics = [], scalar_prefetch = 0 : i64, scratch_operands = 0 : i64, tpu.core_type = #tpu.core_type<tc>} {
    %c0 = arith.constant 0 : index
    %c0_0 = arith.constant 0 : index
    %0 = vector.load %arg0[%c0, %c0_0] : memref<8x768xf32, #tpu.memory_space<vmem>>, vector<8x768xf32>
    %1 = arith.truncf %0 : vector<8x768xf32> to vector<8x768xbf16>
    %c0_1 = arith.constant 0 : index
    %c0_2 = arith.constant 0 : index
    %2 = vector.load %arg1[%c0_1, %c0_2] : memref<768x768xbf16, #tpu.memory_space<vmem>>, vector<768x768xbf16>
    %cst = arith.constant dense<0.000000e+00> : vector<8x768xf32>
    %3 = tpu.matmul %1, %2, %cst {dimension_numbers = #tpu.dot_dimension_numbers<[1], [0], [0], [1], [0, 0, 1, 1], [], []>} : vector<8x768xbf16>, vector<768x768xbf16>, vector<8x768xf32> -> vector<8x768xf32>
    %c0_3 = arith.constant 0 : index
    %c0_4 = arith.constant 0 : index
    %4 = vector.load %arg2[%c0_3, %c0_4] : memref<1x768xf32, #tpu.memory_space<vmem>>, vector<1x768xf32>
    %5 = vector.broadcast %4 : vector<1x768xf32> to vector<8x768xf32>
    %6 = arith.addf %3, %5 : vector<8x768xf32>
    %c0_5 = arith.constant 0 : index
    %c0_6 = arith.constant 0 : index
    %7 = vector.load %arg3[%c0_5, %c0_6] : memref<8x768xf32, #tpu.memory_space<vmem>>, vector<8x768xf32>
    tpu.vector_store %arg3[%c0_5, %c0_6], %6 {strides = array<i32>} : memref<8x768xf32, #tpu.memory_space<vmem>>, vector<8x768xf32>,
    return
  }
}

</mosaic_0001>

<llo_original>
// kernel: pca_forward.1
$region0: #{pca_forward.1}
  #allocation0 [shape = 'u32[]', space=smem, size = 0x4, offset = 0x4, fixed_abs, tag = 'smem constant byte address 0x4 - core index']
  #allocation1 [shape = 'u32[72,128]{1,0:T(1,128)}', space=vmem, size = 0x9000, scoped, tag = 'internal scratch']
  %s0 = inlined_call_operand.vmem [shape: f32[8,768], index: 0, kind: input, shape index: {}]
  %s1 = inlined_call_operand.hbm [shape: bf16[768,768], index: 1, kind: input, shape index: {}]
  %s2 = inlined_call_operand.hbm [shape: f32[1,768], index: 2, kind: input, shape index: {}]
  %s3 = inlined_call_operand.vmem [shape: f32[8,768], index: 3, kind: output, shape index: {}]
  %s4 = sld [smem:[#allocation0]]
  $region30: #{pca_forward.1} parent=0
    _
  %s6 = ssub.s32 1, %s4
  %s7 = scalar_select 0, %s6, %s4
  $region1: #{pca_forward.1} parent=0
    #allocation2 [shape = 'u8[1179648]{0}', space=vmem, size = 0x120000, scoped, tag = 'input window, operand 1, single buffered']
    #allocation3 [shape = 's32[1]{0}', space=sflag, size = 0x4, scoped, tag = 'scoped memory for pca_forward.1']
    #allocation4 [shape = 'u8[3072]{0}', space=vmem, size = 0xc00, scoped, tag = 'input window, operand 2, single buffered']
    #allocation5 [shape = 's32[1]{0}', space=sflag, size = 0x4, scoped, tag = 'scoped memory for pca_forward.1']
    %8 = vsyncpa [#allocation3], 0
    %9 = vsyncpa [#allocation5], 0
    // Predicated region
    $region2: #{pca_forward.1} parent=1 // pred_check
      _
    $region3: #{pca_forward.1} parent=1 // pred_check_branch
      %11 = sbr.rel (0) target = $region5
    $region4: #{pca_forward.1} parent=1 // pred_region
      _
    $region5: #{pca_forward.1} parent=1 // pred_fallthru
      _
    // Predicated region
    $region6: #{pca_forward.1} parent=1 // pred_check
      _
    $region7: #{pca_forward.1} parent=1 // pred_check_branch
      %13 = sbr.rel (0) target = $region9
    $region8: #{pca_forward.1} parent=1 // pred_region
      %15 = vsyncadd [#allocation3], 0
      %s16 = sshll.u32 %s1, 4
      %s17 = int_to_ptr.hbm [resolvable:$true] %s16
      %s18 = sshll.u32 [#allocation2], 4
      %s19 = int_to_ptr.vmem [resolvable:$true] %s18
      %24 = dma.hbm_to_vmem [thread:$0]  %s17, 36864, %s19, [#allocation3], 384, 384, 24
    $region9: #{pca_forward.1} parent=1 // pred_fallthru
      _
    // Predicated region
    $region10: #{pca_forward.1} parent=1 // pred_check
      _
    $region11: #{pca_forward.1} parent=1 // pred_check_branch
      %26 = sbr.rel (0) target = $region13
    $region12: #{pca_forward.1} parent=1 // pred_region
      %28 = vsyncadd [#allocation5], 0
      %s30 = sshll.u32 %s2, 4
      %s31 = int_to_ptr.hbm [resolvable:$true] %s30
      %s32 = sshll.u32 [#allocation4], 4
      %s33 = int_to_ptr.vmem [resolvable:$true] %s32
      %35 = dma.hbm_to_vmem [thread:$0]  %s31, 96, %s33, [#allocation5]
    $region13: #{pca_forward.1} parent=1 // pred_fallthru
      _
    // Predicated region
    $region14: #{pca_forward.1} parent=1 // pred_check
      _
    $region15: #{pca_forward.1} parent=1 // pred_check_branch
      %37 = sbr.rel (0) target = $region17
    $region16: #{pca_forward.1} parent=1 // pred_region
      %39 = dma.done [#allocation3], 36864
    $region17: #{pca_forward.1} parent=1 // pred_fallthru
      _
    // Predicated region
    $region18: #{pca_forward.1} parent=1 // pred_check
      _
    $region19: #{pca_forward.1} parent=1 // pred_check_branch
      %41 = sbr.rel (0) target = $region21
    $region20: #{pca_forward.1} parent=1 // pred_region
      %43 = dma.done [#allocation5], 96
    $region21: #{pca_forward.1} parent=1 // pred_fallthru
      _
    %v44 = vld [vmem:[%s0] sm:$0xff]
    %v45 = vld [vmem:[%s0 + $0x8] sm:$0xff]
    %v46 = vld [vmem:[%s0 + $0x10] sm:$0xff]
    %v47 = vld [vmem:[%s0 + $0x18] sm:$0xff]
    %v48 = vld [vmem:[%s0 + $0x20] sm:$0xff]
    %v49 = vld [vmem:[%s0 + $0x28] sm:$0xff]
    %v50 = vpack.c.bf16 %v44, %v44
    %v51 = vpack.c.bf16 %v45, %v45
    %v52 = vpack.c.bf16 %v46, %v46
    %v53 = vpack.c.bf16 %v47, %v47
    %v54 = vpack.c.bf16 %v48, %v48
    %v55 = vpack.c.bf16 %v49, %v49
    %v56 = vld [vmem:[#allocation2] sm:$0xff]
    %v57 = vld [vmem:[#allocation2 + $0x8] sm:$0xff]
    %v58 = vld [vmem:[#allocation2 + $0x10] sm:$0xff]
    %v59 = vld [vmem:[#allocation2 + $0x18] sm:$0xff]
    %v60 = vld [vmem:[#allocation2 + $0x20] sm:$0xff]
    %v61 = vld [vmem:[#allocation2 + $0x28] sm:$0xff]
    %v62 = vld [vmem:[#allocation2 + $0x30] sm:$0xff]
    %v63 = vld [vmem:[#allocation2 + $0x38] sm:$0xff]
    %v64 = vld [vmem:[#allocation2 + $0x40] sm:$0xff]
    %v65 = vld [vmem:[#allocation2 + $0x48] sm:$0xff]
    %v66 = vld [vmem:[#allocation2 + $0x50] sm:$0xff]
    %v67 = vld [vmem:[#allocation2 + $0x58] sm:$0xff]
    %v68 = vld [vmem:[#allocation2 + $0x60] sm:$0xff]
    %v69 = vld [vmem:[#allocation2 + $0x68] sm:$0xff]
    %v70 = vld [vmem:[#allocation2 + $0x70] sm:$0xff]
    %v71 = vld [vmem:[#allocation2 + $0x78] sm:$0xff]
    %v72 = vld [vmem:[#allocation2 + $0x80] sm:$0xff]
    %v73 = vld [vmem:[#allocation2 + $0x88] sm:$0xff]
    %v74 = vld [vmem:[#allocation2 + $0x90] sm:$0xff]
    %v75 = vld [vmem:[#allocation2 + $0x98] sm:$0xff]
    %v76 = vld [vmem:[#allocation2 + $0xa0] sm:$0xff]
    %v77 = vld [vmem:[#allocation2 + $0xa8] sm:$0xff]
    %v78 = vld [vmem:[#allocation2 + $0xb0] sm:$0xff]
    %v79 = vld [vmem:[#allocation2 + $0xb8] sm:$0xff]
    %v80 = vld [vmem:[#allocation2 + $0xc0] sm:$0xff]
    %v81 = vld [vmem:[#allocation2 + $0xc8] sm:$0xff]
    %v82 = vld [vmem:[#allocation2 + $0xd0] sm:$0xff]
    %v83 = vld [vmem:[#allocation2 + $0xd8] sm:$0xff]
    %v84 = vld [vmem:[#allocation2 + $0xe0] sm:$0xff]
    %v85 = vld [vmem:[#allocation2 + $0xe8] sm:$0xff]
    %v86 = vld [vmem:[#allocation2 + $0xf0] sm:$0xff]
    %v87 = vld [vmem:[#allocation2 + $0xf8] sm:$0xff]
    %v88 = vld [vmem:[#allocation2 + $0x100] sm:$0xff]
    %v89 = vld [vmem:[#allocation2 + $0x108] sm:$0xff]
    %v90 = vld [vmem:[#allocation2 + $0x110] sm:$0xff]
    %v91 = vld [vmem:[#allocation2 + $0x118] sm:$0xff]
    %v92 = vld [vmem:[#allocation2 + $0x120] sm:$0xff]
    %v93 = vld [vmem:[#allocation2 + $0x128] sm:$0xff]
    %v94 = vld [vmem:[#allocation2 + $0x130] sm:$0xff]
    %v95 = vld [vmem:[#allocation2 + $0x138] sm:$0xff]
    %v96 = vld [vmem:[#allocation2 + $0x140] sm:$0xff]
    %v97 = vld [vmem:[#allocation2 + $0x148] sm:$0xff]
    %v98 = vld [vmem:[#allocation2 + $0x150] sm:$0xff]
    %v99 = vld [vmem:[#allocation2 + $0x158] sm:$0xff]
    %v100 = vld [vmem:[#allocation2 + $0x160] sm:$0xff]
    %v101 = vld [vmem:[#allocation2 + $0x168] sm:$0xff]
    %v102 = vld [vmem:[#allocation2 + $0x170] sm:$0xff]
    %v103 = vld [vmem:[#allocation2 + $0x178] sm:$0xff]
    %v104 = vld [vmem:[#allocation2 + $0x180] sm:$0xff]
    %v105 = vld [vmem:[#allocation2 + $0x188] sm:$0xff]
    %v106 = vld [vmem:[#allocation2 + $0x190] sm:$0xff]
    %v107 = vld [vmem:[#allocation2 + $0x198] sm:$0xff]
    %v108 = vld [vmem:[#allocation2 + $0x1a0] sm:$0xff]
    %v109 = vld [vmem:[#allocation2 + $0x1a8] sm:$0xff]
    %v110 = vld [vmem:[#allocation2 + $0x1b0] sm:$0xff]
    %v111 = vld [vmem:[#allocation2 + $0x1b8] sm:$0xff]
    %v112 = vld [vmem:[#allocation2 + $0x1c0] sm:$0xff]
    %v113 = vld [vmem:[#allocation2 + $0x1c8] sm:$0xff]
    %v114 = vld [vmem:[#allocation2 + $0x1d0] sm:$0xff]
    %v115 = vld [vmem:[#allocation2 + $0x1d8] sm:$0xff]
    %v116 = vld [vmem:[#allocation2 + $0x1e0] sm:$0xff]
    %v117 = vld [vmem:[#allocation2 + $0x1e8] sm:$0xff]
    %v118 = vld [vmem:[#allocation2 + $0x1f0] sm:$0xff]
    %v119 = vld [vmem:[#allocation2 + $0x1f8] sm:$0xff]
    %v120 = vld [vmem:[#allocation2 + $0x200] sm:$0xff]
    %v121 = vld [vmem:[#allocation2 + $0x208] sm:$0xff]
    %v122 = vld [vmem:[#allocation2 + $0x210] sm:$0xff]
    %v123 = vld [vmem:[#allocation2 + $0x218] sm:$0xff]
    %v124 = vld [vmem:[#allocation2 + $0x220] sm:$0xff]
    %v125 = vld [vmem:[#allocation2 + $0x228] sm:$0xff]
    %v126 = vld [vmem:[#allocation2 + $0x230] sm:$0xff]
    %v127 = vld [vmem:[#allocation2 + $0x238] sm:$0xff]
    %v128 = vld [vmem:[#allocation2 + $0x240] sm:$0xff]
    %v129 = vld [vmem:[#allocation2 + $0x248] sm:$0xff]
    %v130 = vld [vmem:[#allocation2 + $0x250] sm:$0xff]
    %v131 = vld [vmem:[#allocation2 + $0x258] sm:$0xff]
    %v132 = vld [vmem:[#allocation2 + $0x260] sm:$0xff]
    %v133 = vld [vmem:[#allocation2 + $0x268] sm:$0xff]
    %v134 = vld [vmem:[#allocation2 + $0x270] sm:$0xff]
    %v135 = vld [vmem:[#allocation2 + $0x278] sm:$0xff]
    %v136 = vld [vmem:[#allocation2 + $0x280] sm:$0xff]
    %v137 = vld [vmem:[#allocation2 + $0x288] sm:$0xff]
    %v138 = vld [vmem:[#allocation2 + $0x290] sm:$0xff]
    %v139 = vld [vmem:[#allocation2 + $0x298] sm:$0xff]
    %v140 = vld [vmem:[#allocation2 + $0x2a0] sm:$0xff]
    %v141 = vld [vmem:[#allocation2 + $0x2a8] sm:$0xff]
    %v142 = vld [vmem:[#allocation2 + $0x2b0] sm:$0xff]
    %v143 = vld [vmem:[#allocation2 + $0x2b8] sm:$0xff]
    %v144 = vld [vmem:[#allocation2 + $0x2c0] sm:$0xff]
    %v145 = vld [vmem:[#allocation2 + $0x2c8] sm:$0xff]
    %v146 = vld [vmem:[#allocation2 + $0x2d0] sm:$0xff]
    %v147 = vld [vmem:[#allocation2 + $0x2d8] sm:$0xff]
    %v148 = vld [vmem:[#allocation2 + $0x2e0] sm:$0xff]
    %v149 = vld [vmem:[#allocation2 + $0x2e8] sm:$0xff]
    %v150 = vld [vmem:[#allocation2 + $0x2f0] sm:$0xff]
    %v151 = vld [vmem:[#allocation2 + $0x2f8] sm:$0xff]
    %v152 = vld [vmem:[#allocation2 + $0x300] sm:$0xff]
    %v153 = vld [vmem:[#allocation2 + $0x308] sm:$0xff]
    %v154 = vld [vmem:[#allocation2 + $0x310] sm:$0xff]
    %v155 = vld [vmem:[#allocation2 + $0x318] sm:$0xff]
    %v156 = vld [vmem:[#allocation2 + $0x320] sm:$0xff]
    %v157 = vld [vmem:[#allocation2 + $0x328] sm:$0xff]
    %v158 = vld [vmem:[#allocation2 + $0x330] sm:$0xff]
    %v159 = vld [vmem:[#allocation2 + $0x338] sm:$0xff]
    %v160 = vld [vmem:[#allocation2 + $0x340] sm:$0xff]
    %v161 = vld [vmem:[#allocation2 + $0x348] sm:$0xff]
    %v162 = vld [vmem:[#allocation2 + $0x350] sm:$0xff]
    %v163 = vld [vmem:[#allocation2 + $0x358] sm:$0xff]
    %v164 = vld [vmem:[#allocation2 + $0x360] sm:$0xff]
    %v165 = vld [vmem:[#allocation2 + $0x368] sm:$0xff]
    %v166 = vld [vmem:[#allocation2 + $0x370] sm:$0xff]
    %v167 = vld [vmem:[#allocation2 + $0x378] sm:$0xff]
    %v168 = vld [vmem:[#allocation2 + $0x380] sm:$0xff]
    %v169 = vld [vmem:[#allocation2 + $0x388] sm:$0xff]
    %v170 = vld [vmem:[#allocation2 + $0x390] sm:$0xff]
    %v171 = vld [vmem:[#allocation2 + $0x398] sm:$0xff]
    %v172 = vld [vmem:[#allocation2 + $0x3a0] sm:$0xff]
    %v173 = vld [vmem:[#allocation2 + $0x3a8] sm:$0xff]
    %v174 = vld [vmem:[#allocation2 + $0x3b0] sm:$0xff]
    %v175 = vld [vmem:[#allocation2 + $0x3b8] sm:$0xff]
    %v176 = vld [vmem:[#allocation2 + $0x3c0] sm:$0xff]
    %v177 = vld [vmem:[#allocation2 + $0x3c8] sm:$0xff]
    %v178 = vld [vmem:[#allocation2 + $0x3d0] sm:$0xff]
    %v179 = vld [vmem:[#allocation2 + $0x3d8] sm:$0xff]
    %v180 = vld [vmem:[#allocation2 + $0x3e0] sm:$0xff]
    %v181 = vld [vmem:[#allocation2 + $0x3e8] sm:$0xff]
    %v182 = vld [vmem:[#allocation2 + $0x3f0] sm:$0xff]
    %v183 = vld [vmem:[#allocation2 + $0x3f8] sm:$0xff]
    %v184 = vld [vmem:[#allocation2 + $0x400] sm:$0xff]
    %v185 = vld [vmem:[#allocation2 + $0x408] sm:$0xff]
    %v186 = vld [vmem:[#allocation2 + $0x410] sm:$0xff]
    %v187 = vld [vmem:[#allocation2 + $0x418] sm:$0xff]
    %v188 = vld [vmem:[#allocation2 + $0x420] sm:$0xff]
    %v189 = vld [vmem:[#allocation2 + $0x428] sm:$0xff]
    %v190 = vld [vmem:[#allocation2 + $0x430] sm:$0xff]
    %v191 = vld [vmem:[#allocation2 + $0x438] sm:$0xff]
    %v192 = vld [vmem:[#allocation2 + $0x440] sm:$0xff]
    %v193 = vld [vmem:[#allocation2 + $0x448] sm:$0xff]
    %v194 = vld [vmem:[#allocation2 + $0x450] sm:$0xff]
    %v195 = vld [vmem:[#allocation2 + $0x458] sm:$0xff]
    %v196 = vld [vmem:[#allocation2 + $0x460] sm:$0xff]
    %v197 = vld [vmem:[#allocation2 + $0x468] sm:$0xff]
    %v198 = vld [vmem:[#allocation2 + $0x470] sm:$0xff]
    %v199 = vld [vmem:[#allocation2 + $0x478] sm:$0xff]
    %v200 = vld [vmem:[#allocation2 + $0x480] sm:$0xff]
    %v201 = vld [vmem:[#allocation2 + $0x488] sm:$0xff]
    %v202 = vld [vmem:[#allocation2 + $0x490] sm:$0xff]
    %v203 = vld [vmem:[#allocation2 + $0x498] sm:$0xff]
    %v204 = vld [vmem:[#allocation2 + $0x4a0] sm:$0xff]
    %v205 = vld [vmem:[#allocation2 + $0x4a8] sm:$0xff]
    %v206 = vld [vmem:[#allocation2 + $0x4b0] sm:$0xff]
    %v207 = vld [vmem:[#allocation2 + $0x4b8] sm:$0xff]
    %v208 = vld [vmem:[#allocation2 + $0x4c0] sm:$0xff]
    %v209 = vld [vmem:[#allocation2 + $0x4c8] sm:$0xff]
    %v210 = vld [vmem:[#allocation2 + $0x4d0] sm:$0xff]
    %v211 = vld [vmem:[#allocation2 + $0x4d8] sm:$0xff]
    %v212 = vld [vmem:[#allocation2 + $0x4e0] sm:$0xff]
    %v213 = vld [vmem:[#allocation2 + $0x4e8] sm:$0xff]
    %v214 = vld [vmem:[#allocation2 + $0x4f0] sm:$0xff]
    %v215 = vld [vmem:[#allocation2 + $0x4f8] sm:$0xff]
    %v216 = vld [vmem:[#allocation2 + $0x500] sm:$0xff]
    %v217 = vld [vmem:[#allocation2 + $0x508] sm:$0xff]
    %v218 = vld [vmem:[#allocation2 + $0x510] sm:$0xff]
    %v219 = vld [vmem:[#allocation2 + $0x518] sm:$0xff]
    %v220 = vld [vmem:[#allocation2 + $0x520] sm:$0xff]
    %v221 = vld [vmem:[#allocation2 + $0x528] sm:$0xff]
    %v222 = vld [vmem:[#allocation2 + $0x530] sm:$0xff]
    %v223 = vld [vmem:[#allocation2 + $0x538] sm:$0xff]
    %v224 = vld [vmem:[#allocation2 + $0x540] sm:$0xff]
    %v225 = vld [vmem:[#allocation2 + $0x548] sm:$0xff]
    %v226 = vld [vmem:[#allocation2 + $0x550] sm:$0xff]
    %v227 = vld [vmem:[#allocation2 + $0x558] sm:$0xff]
    %v228 = vld [vmem:[#allocation2 + $0x560] sm:$0xff]
    %v229 = vld [vmem:[#allocation2 + $0x568] sm:$0xff]
    %v230 = vld [vmem:[#allocation2 + $0x570] sm:$0xff]
    %v231 = vld [vmem:[#allocation2 + $0x578] sm:$0xff]
    %v232 = vld [vmem:[#allocation2 + $0x580] sm:$0xff]
    %v233 = vld [vmem:[#allocation2 + $0x588] sm:$0xff]
    %v234 = vld [vmem:[#allocation2 + $0x590] sm:$0xff]
    %v235 = vld [vmem:[#allocation2 + $0x598] sm:$0xff]
    %v236 = vld [vmem:[#allocation2 + $0x5a0] sm:$0xff]
    %v237 = vld [vmem:[#allocation2 + $0x5a8] sm:$0xff]
    %v238 = vld [vmem:[#allocation2 + $0x5b0] sm:$0xff]
    %v239 = vld [vmem:[#allocation2 + $0x5b8] sm:$0xff]
    %v240 = vld [vmem:[#allocation2 + $0x5c0] sm:$0xff]
    %v241 = vld [vmem:[#allocation2 + $0x5c8] sm:$0xff]
    %v242 = vld [vmem:[#allocation2 + $0x5d0] sm:$0xff]
    %v243 = vld [vmem:[#allocation2 + $0x5d8] sm:$0xff]
    %v244 = vld [vmem:[#allocation2 + $0x5e0] sm:$0xff]
    %v245 = vld [vmem:[#allocation2 + $0x5e8] sm:$0xff]
    %v246 = vld [vmem:[#allocation2 + $0x5f0] sm:$0xff]
    %v247 = vld [vmem:[#allocation2 + $0x5f8] sm:$0xff]
    %v248 = vld [vmem:[#allocation2 + $0x600] sm:$0xff]
    %v249 = vld [vmem:[#allocation2 + $0x608] sm:$0xff]
    %v250 = vld [vmem:[#allocation2 + $0x610] sm:$0xff]
    %v251 = vld [vmem:[#allocation2 + $0x618] sm:$0xff]
    %v252 = vld [vmem:[#allocation2 + $0x620] sm:$0xff]
    %v253 = vld [vmem:[#allocation2 + $0x628] sm:$0xff]
    %v254 = vld [vmem:[#allocation2 + $0x630] sm:$0xff]
    %v255 = vld [vmem:[#allocation2 + $0x638] sm:$0xff]
    %v256 = vld [vmem:[#allocation2 + $0x640] sm:$0xff]
    %v257 = vld [vmem:[#allocation2 + $0x648] sm:$0xff]
    %v258 = vld [vmem:[#allocation2 + $0x650] sm:$0xff]
    %v259 = vld [vmem:[#allocation2 + $0x658] sm:$0xff]
    %v260 = vld [vmem:[#allocation2 + $0x660] sm:$0xff]
    %v261 = vld [vmem:[#allocation2 + $0x668] sm:$0xff]
    %v262 = vld [vmem:[#allocation2 + $0x670] sm:$0xff]
    %v263 = vld [vmem:[#allocation2 + $0x678] sm:$0xff]
    %v264 = vld [vmem:[#allocation2 + $0x680] sm:$0xff]
    %v265 = vld [vmem:[#allocation2 + $0x688] sm:$0xff]
    %v266 = vld [vmem:[#allocation2 + $0x690] sm:$0xff]
    %v267 = vld [vmem:[#allocation2 + $0x698] sm:$0xff]
    %v268 = vld [vmem:[#allocation2 + $0x6a0] sm:$0xff]
    %v269 = vld [vmem:[#allocation2 + $0x6a8] sm:$0xff]
    %v270 = vld [vmem:[#allocation2 + $0x6b0] sm:$0xff]
    %v271 = vld [vmem:[#allocation2 + $0x6b8] sm:$0xff]
    %v272 = vld [vmem:[#allocation2 + $0x6c0] sm:$0xff]
    %v273 = vld [vmem:[#allocation2 + $0x6c8] sm:$0xff]
    %v274 = vld [vmem:[#allocation2 + $0x6d0] sm:$0xff]
    %v275 = vld [vmem:[#allocation2 + $0x6d8] sm:$0xff]
    %v276 = vld [vmem:[#allocation2 + $0x6e0] sm:$0xff]
    %v277 = vld [vmem:[#allocation2 + $0x6e8] sm:$0xff]
    %v278 = vld [vmem:[#allocation2 + $0x6f0] sm:$0xff]
    %v279 = vld [vmem:[#allocation2 + $0x6f8] sm:$0xff]
    %v280 = vld [vmem:[#allocation2 + $0x700] sm:$0xff]
    %v281 = vld [vmem:[#allocation2 + $0x708] sm:$0xff]
    %v282 = vld [vmem:[#allocation2 + $0x710] sm:$0xff]
    %v283 = vld [vmem:[#allocation2 + $0x718] sm:$0xff]
    %v284 = vld [vmem:[#allocation2 + $0x720] sm:$0xff]
    %v285 = vld [vmem:[#allocation2 + $0x728] sm:$0xff]
    %v286 = vld [vmem:[#allocation2 + $0x730] sm:$0xff]
    %v287 = vld [vmem:[#allocation2 + $0x738] sm:$0xff]
    %v288 = vld [vmem:[#allocation2 + $0x740] sm:$0xff]
    %v289 = vld [vmem:[#allocation2 + $0x748] sm:$0xff]
    %v290 = vld [vmem:[#allocation2 + $0x750] sm:$0xff]
    %v291 = vld [vmem:[#allocation2 + $0x758] sm:$0xff]
    %v292 = vld [vmem:[#allocation2 + $0x760] sm:$0xff]
    %v293 = vld [vmem:[#allocation2 + $0x768] sm:$0xff]
    %v294 = vld [vmem:[#allocation2 + $0x770] sm:$0xff]
    %v295 = vld [vmem:[#allocation2 + $0x778] sm:$0xff]
    %v296 = vld [vmem:[#allocation2 + $0x780] sm:$0xff]
    %v297 = vld [vmem:[#allocation2 + $0x788] sm:$0xff]
    %v298 = vld [vmem:[#allocation2 + $0x790] sm:$0xff]
    %v299 = vld [vmem:[#allocation2 + $0x798] sm:$0xff]
    %v300 = vld [vmem:[#allocation2 + $0x7a0] sm:$0xff]
    %v301 = vld [vmem:[#allocation2 + $0x7a8] sm:$0xff]
    %v302 = vld [vmem:[#allocation2 + $0x7b0] sm:$0xff]
    %v303 = vld [vmem:[#allocation2 + $0x7b8] sm:$0xff]
    %v304 = vld [vmem:[#allocation2 + $0x7c0] sm:$0xff]
    %v305 = vld [vmem:[#allocation2 + $0x7c8] sm:$0xff]
    %v306 = vld [vmem:[#allocation2 + $0x7d0] sm:$0xff]
    %v307 = vld [vmem:[#allocation2 + $0x7d8] sm:$0xff]
    %v308 = vld [vmem:[#allocation2 + $0x7e0] sm:$0xff]
    %v309 = vld [vmem:[#allocation2 + $0x7e8] sm:$0xff]
    %v310 = vld [vmem:[#allocation2 + $0x7f0] sm:$0xff]
    %v311 = vld [vmem:[#allocation2 + $0x7f8] sm:$0xff]
    %v312 = vld [vmem:[#allocation2 + $0x800] sm:$0xff]
    %v313 = vld [vmem:[#allocation2 + $0x808] sm:$0xff]
    %v314 = vld [vmem:[#allocation2 + $0x810] sm:$0xff]
    %v315 = vld [vmem:[#allocation2 + $0x818] sm:$0xff]
    %v316 = vld [vmem:[#allocation2 + $0x820] sm:$0xff]
    %v317 = vld [vmem:[#allocation2 + $0x828] sm:$0xff]
    %v318 = vld [vmem:[#allocation2 + $0x830] sm:$0xff]
    %v319 = vld [vmem:[#allocation2 + $0x838] sm:$0xff]
    %v320 = vld [vmem:[#allocation2 + $0x840] sm:$0xff]
    %v321 = vld [vmem:[#allocation2 + $0x848] sm:$0xff]
    %v322 = vld [vmem:[#allocation2 + $0x850] sm:$0xff]
    %v323 = vld [vmem:[#allocation2 + $0x858] sm:$0xff]
    %v324 = vld [vmem:[#allocation2 + $0x860] sm:$0xff]
    %v325 = vld [vmem:[#allocation2 + $0x868] sm:$0xff]
    %v326 = vld [vmem:[#allocation2 + $0x870] sm:$0xff]
    %v327 = vld [vmem:[#allocation2 + $0x878] sm:$0xff]
    %v328 = vld [vmem:[#allocation2 + $0x880] sm:$0xff]
    %v329 = vld [vmem:[#allocation2 + $0x888] sm:$0xff]
    %v330 = vld [vmem:[#allocation2 + $0x890] sm:$0xff]
    %v331 = vld [vmem:[#allocation2 + $0x898] sm:$0xff]
    %v332 = vld [vmem:[#allocation2 + $0x8a0] sm:$0xff]
    %v333 = vld [vmem:[#allocation2 + $0x8a8] sm:$0xff]
    %v334 = vld [vmem:[#allocation2 + $0x8b0] sm:$0xff]
    %v335 = vld [vmem:[#allocation2 + $0x8b8] sm:$0xff]
    %v336 = vld [vmem:[#allocation2 + $0x8c0] sm:$0xff]
    %v337 = vld [vmem:[#allocation2 + $0x8c8] sm:$0xff]
    %v338 = vld [vmem:[#allocation2 + $0x8d0] sm:$0xff]
    %v339 = vld [vmem:[#allocation2 + $0x8d8] sm:$0xff]
    %v340 = vld [vmem:[#allocation2 + $0x8e0] sm:$0xff]
    %v341 = vld [vmem:[#allocation2 + $0x8e8] sm:$0xff]
    %v342 = vld [vmem:[#allocation2 + $0x8f0] sm:$0xff]
    %v343 = vld [vmem:[#allocation2 + $0x8f8] sm:$0xff]
    %v344 = vld [vmem:[#allocation4] sm:$0x3f]
    %v346 = vperm.slane %v344, 0
    %v347 = vperm.slane %v344, 1
    %v348 = vperm.slane %v344, 2
    %v349 = vperm.slane %v344, 3
    %v350 = vperm.slane %v344, 4
    %v351 = vperm.slane %v344, 5
    %v646 = vunpack.c.l.b16 %v56
    %v647 = vunpack.c.h.b16 %v56
    %v648 = vunpack.c.l.b16 %v57
    %v649 = vunpack.c.h.b16 %v57
    %v650 = vunpack.c.l.b16 %v58
    %v651 = vunpack.c.h.b16 %v58
    %v652 = vunpack.c.l.b16 %v59
    %v653 = vunpack.c.h.b16 %v59
    %v654 = vunpack.c.l.b16 %v60
    %v655 = vunpack.c.h.b16 %v60
    %v656 = vunpack.c.l.b16 %v61
    %v657 = vunpack.c.h.b16 %v61
    %v658 = vunpack.c.l.b16 %v62
    %v659 = vunpack.c.h.b16 %v62
    %v660 = vunpack.c.l.b16 %v63
    %v661 = vunpack.c.h.b16 %v63
    %v662 = vunpack.c.l.b16 %v64
    %v663 = vunpack.c.h.b16 %v64
    %v664 = vunpack.c.l.b16 %v65
    %v665 = vunpack.c.h.b16 %v65
    %v666 = vunpack.c.l.b16 %v66
    %v667 = vunpack.c.h.b16 %v66
    %v668 = vunpack.c.l.b16 %v67
    %v669 = vunpack.c.h.b16 %v67
    %v670 = vunpack.c.l.b16 %v68
    %v671 = vunpack.c.h.b16 %v68
    %v672 = vunpack.c.l.b16 %v69
    %v673 = vunpack.c.h.b16 %v69
    %v674 = vunpack.c.l.b16 %v70
    %v675 = vunpack.c.h.b16 %v70
    %v676 = vunpack.c.l.b16 %v71
    %v677 = vunpack.c.h.b16 %v71
    %v678 = vunpack.c.l.b16 %v72
    %v679 = vunpack.c.h.b16 %v72
    %v680 = vunpack.c.l.b16 %v73
    %v681 = vunpack.c.h.b16 %v73
    %v682 = vunpack.c.l.b16 %v74
    %v683 = vunpack.c.h.b16 %v74
    %v684 = vunpack.c.l.b16 %v75
    %v685 = vunpack.c.h.b16 %v75
    %v686 = vunpack.c.l.b16 %v76
    %v687 = vunpack.c.h.b16 %v76
    %v688 = vunpack.c.l.b16 %v77
    %v689 = vunpack.c.h.b16 %v77
    %v690 = vunpack.c.l.b16 %v78
    %v691 = vunpack.c.h.b16 %v78
    %v692 = vunpack.c.l.b16 %v79
    %v693 = vunpack.c.h.b16 %v79
    %v694 = vunpack.c.l.b16 %v80
    %v695 = vunpack.c.h.b16 %v80
    %v696 = vunpack.c.l.b16 %v81
    %v697 = vunpack.c.h.b16 %v81
    %v698 = vunpack.c.l.b16 %v82
    %v699 = vunpack.c.h.b16 %v82
    %v700 = vunpack.c.l.b16 %v83
    %v701 = vunpack.c.h.b16 %v83
    %v702 = vunpack.c.l.b16 %v84
    %v703 = vunpack.c.h.b16 %v84
    %v704 = vunpack.c.l.b16 %v85
    %v705 = vunpack.c.h.b16 %v85
    %v706 = vunpack.c.l.b16 %v86
    %v707 = vunpack.c.h.b16 %v86
    %v708 = vunpack.c.l.b16 %v87
    %v709 = vunpack.c.h.b16 %v87
    %v710 = vunpack.c.l.b16 %v88
    %v711 = vunpack.c.h.b16 %v88
    %v712 = vunpack.c.l.b16 %v89
    %v713 = vunpack.c.h.b16 %v89
    %v714 = vunpack.c.l.b16 %v90
    %v715 = vunpack.c.h.b16 %v90
    %v716 = vunpack.c.l.b16 %v91
    %v717 = vunpack.c.h.b16 %v91
    %v718 = vunpack.c.l.b16 %v92
    %v719 = vunpack.c.h.b16 %v92
    %v720 = vunpack.c.l.b16 %v93
    %v721 = vunpack.c.h.b16 %v93
    %v722 = vunpack.c.l.b16 %v94
    %v723 = vunpack.c.h.b16 %v94
    %v724 = vunpack.c.l.b16 %v95
    %v725 = vunpack.c.h.b16 %v95
    %v726 = vunpack.c.l.b16 %v96
    %v727 = vunpack.c.h.b16 %v96
    %v728 = vunpack.c.l.b16 %v97
    %v729 = vunpack.c.h.b16 %v97
    %v730 = vunpack.c.l.b16 %v98
    %v731 = vunpack.c.h.b16 %v98
    %v732 = vunpack.c.l.b16 %v99
    %v733 = vunpack.c.h.b16 %v99
    %v734 = vunpack.c.l.b16 %v100
    %v735 = vunpack.c.h.b16 %v100
    %v736 = vunpack.c.l.b16 %v101
    %v737 = vunpack.c.h.b16 %v101
    %v738 = vunpack.c.l.b16 %v102
    %v739 = vunpack.c.h.b16 %v102
    %v740 = vunpack.c.l.b16 %v103
    %v741 = vunpack.c.h.b16 %v103
    %v742 = vunpack.c.l.b16 %v104
    %v743 = vunpack.c.h.b16 %v104
    %v744 = vunpack.c.l.b16 %v105
    %v745 = vunpack.c.h.b16 %v105
    %v746 = vunpack.c.l.b16 %v106
    %v747 = vunpack.c.h.b16 %v106
    %v748 = vunpack.c.l.b16 %v107
    %v749 = vunpack.c.h.b16 %v107
    %v750 = vunpack.c.l.b16 %v108
    %v751 = vunpack.c.h.b16 %v108
    %v752 = vunpack.c.l.b16 %v109
    %v753 = vunpack.c.h.b16 %v109
    %v754 = vunpack.c.l.b16 %v110
    %v755 = vunpack.c.h.b16 %v110
    %v756 = vunpack.c.l.b16 %v111
    %v757 = vunpack.c.h.b16 %v111
    %v758 = vunpack.c.l.b16 %v112
    %v759 = vunpack.c.h.b16 %v112
    %v760 = vunpack.c.l.b16 %v113
    %v761 = vunpack.c.h.b16 %v113
    %v762 = vunpack.c.l.b16 %v114
    %v763 = vunpack.c.h.b16 %v114
    %v764 = vunpack.c.l.b16 %v115
    %v765 = vunpack.c.h.b16 %v115
    %v766 = vunpack.c.l.b16 %v116
    %v767 = vunpack.c.h.b16 %v116
    %v768 = vunpack.c.l.b16 %v117
    %v769 = vunpack.c.h.b16 %v117
    %v770 = vunpack.c.l.b16 %v118
    %v771 = vunpack.c.h.b16 %v118
    %v772 = vunpack.c.l.b16 %v119
    %v773 = vunpack.c.h.b16 %v119
    %v774 = vunpack.c.l.b16 %v120
    %v775 = vunpack.c.h.b16 %v120
    %v776 = vunpack.c.l.b16 %v121
    %v777 = vunpack.c.h.b16 %v121
    %v778 = vunpack.c.l.b16 %v122
    %v779 = vunpack.c.h.b16 %v122
    %v780 = vunpack.c.l.b16 %v123
    %v781 = vunpack.c.h.b16 %v123
    %v782 = vunpack.c.l.b16 %v124
    %v783 = vunpack.c.h.b16 %v124
    %v784 = vunpack.c.l.b16 %v125
    %v785 = vunpack.c.h.b16 %v125
    %v786 = vunpack.c.l.b16 %v126
    %v787 = vunpack.c.h.b16 %v126
    %v788 = vunpack.c.l.b16 %v127
    %v789 = vunpack.c.h.b16 %v127
    %v790 = vunpack.c.l.b16 %v128
    %v791 = vunpack.c.h.b16 %v128
    %v792 = vunpack.c.l.b16 %v129
    %v793 = vunpack.c.h.b16 %v129
    %v794 = vunpack.c.l.b16 %v130
    %v795 = vunpack.c.h.b16 %v130
    %v796 = vunpack.c.l.b16 %v131
    %v797 = vunpack.c.h.b16 %v131
    %v798 = vunpack.c.l.b16 %v132
    %v799 = vunpack.c.h.b16 %v132
    %v800 = vunpack.c.l.b16 %v133
    %v801 = vunpack.c.h.b16 %v133
    %v802 = vunpack.c.l.b16 %v134
    %v803 = vunpack.c.h.b16 %v134
    %v804 = vunpack.c.l.b16 %v135
    %v805 = vunpack.c.h.b16 %v135
    %v806 = vunpack.c.l.b16 %v136
    %v807 = vunpack.c.h.b16 %v136
    %v808 = vunpack.c.l.b16 %v137
    %v809 = vunpack.c.h.b16 %v137
    %v810 = vunpack.c.l.b16 %v138
    %v811 = vunpack.c.h.b16 %v138
    %v812 = vunpack.c.l.b16 %v139
    %v813 = vunpack.c.h.b16 %v139
    %v814 = vunpack.c.l.b16 %v140
    %v815 = vunpack.c.h.b16 %v140
    %v816 = vunpack.c.l.b16 %v141
    %v817 = vunpack.c.h.b16 %v141
    %v818 = vunpack.c.l.b16 %v142
    %v819 = vunpack.c.h.b16 %v142
    %v820 = vunpack.c.l.b16 %v143
    %v821 = vunpack.c.h.b16 %v143
    %v822 = vunpack.c.l.b16 %v144
    %v823 = vunpack.c.h.b16 %v144
    %v824 = vunpack.c.l.b16 %v145
    %v825 = vunpack.c.h.b16 %v145
    %v826 = vunpack.c.l.b16 %v146
    %v827 = vunpack.c.h.b16 %v146
    %v828 = vunpack.c.l.b16 %v147
    %v829 = vunpack.c.h.b16 %v147
    %v830 = vunpack.c.l.b16 %v148
    %v831 = vunpack.c.h.b16 %v148
    %v832 = vunpack.c.l.b16 %v149
    %v833 = vunpack.c.h.b16 %v149
    %v834 = vunpack.c.l.b16 %v150
    %v835 = vunpack.c.h.b16 %v150
    %v836 = vunpack.c.l.b16 %v151
    %v837 = vunpack.c.h.b16 %v151
    %v838 = vunpack.c.l.b16 %v152
    %v839 = vunpack.c.h.b16 %v152
    %v840 = vunpack.c.l.b16 %v153
    %v841 = vunpack.c.h.b16 %v153
    %v842 = vunpack.c.l.b16 %v154
    %v843 = vunpack.c.h.b16 %v154
    %v844 = vunpack.c.l.b16 %v155
    %v845 = vunpack.c.h.b16 %v155
    %v846 = vunpack.c.l.b16 %v156
    %v847 = vunpack.c.h.b16 %v156
    %v848 = vunpack.c.l.b16 %v157
    %v849 = vunpack.c.h.b16 %v157
    %v850 = vunpack.c.l.b16 %v158
    %v851 = vunpack.c.h.b16 %v158
    %v852 = vunpack.c.l.b16 %v159
    %v853 = vunpack.c.h.b16 %v159
    %v854 = vunpack.c.l.b16 %v160
    %v855 = vunpack.c.h.b16 %v160
    %v856 = vunpack.c.l.b16 %v161
    %v857 = vunpack.c.h.b16 %v161
    %v858 = vunpack.c.l.b16 %v162
    %v859 = vunpack.c.h.b16 %v162
    %v860 = vunpack.c.l.b16 %v163
    %v861 = vunpack.c.h.b16 %v163
    %v862 = vunpack.c.l.b16 %v164
    %v863 = vunpack.c.h.b16 %v164
    %v864 = vunpack.c.l.b16 %v165
    %v865 = vunpack.c.h.b16 %v165
    %v866 = vunpack.c.l.b16 %v166
    %v867 = vunpack.c.h.b16 %v166
    %v868 = vunpack.c.l.b16 %v167
    %v869 = vunpack.c.h.b16 %v167
    %v870 = vunpack.c.l.b16 %v168
    %v871 = vunpack.c.h.b16 %v168
    %v872 = vunpack.c.l.b16 %v169
    %v873 = vunpack.c.h.b16 %v169
    %v874 = vunpack.c.l.b16 %v170
    %v875 = vunpack.c.h.b16 %v170
    %v876 = vunpack.c.l.b16 %v171
    %v877 = vunpack.c.h.b16 %v171
    %v878 = vunpack.c.l.b16 %v172
    %v879 = vunpack.c.h.b16 %v172
    %v880 = vunpack.c.l.b16 %v173
    %v881 = vunpack.c.h.b16 %v173
    %v882 = vunpack.c.l.b16 %v174
    %v883 = vunpack.c.h.b16 %v174
    %v884 = vunpack.c.l.b16 %v175
    %v885 = vunpack.c.h.b16 %v175
    %v886 = vunpack.c.l.b16 %v176
    %v887 = vunpack.c.h.b16 %v176
    %v888 = vunpack.c.l.b16 %v177
    %v889 = vunpack.c.h.b16 %v177
    %v890 = vunpack.c.l.b16 %v178
    %v891 = vunpack.c.h.b16 %v178
    %v892 = vunpack.c.l.b16 %v179
    %v893 = vunpack.c.h.b16 %v179
    %v894 = vunpack.c.l.b16 %v180
    %v895 = vunpack.c.h.b16 %v180
    %v896 = vunpack.c.l.b16 %v181
    %v897 = vunpack.c.h.b16 %v181
    %v898 = vunpack.c.l.b16 %v182
    %v899 = vunpack.c.h.b16 %v182
    %v900 = vunpack.c.l.b16 %v183
    %v901 = vunpack.c.h.b16 %v183
    %v902 = vunpack.c.l.b16 %v184
    %v903 = vunpack.c.h.b16 %v184
    %v904 = vunpack.c.l.b16 %v185
    %v905 = vunpack.c.h.b16 %v185
    %v906 = vunpack.c.l.b16 %v186
    %v907 = vunpack.c.h.b16 %v186
    %v908 = vunpack.c.l.b16 %v187
    %v909 = vunpack.c.h.b16 %v187
    %v910 = vunpack.c.l.b16 %v188
    %v911 = vunpack.c.h.b16 %v188
    %v912 = vunpack.c.l.b16 %v189
    %v913 = vunpack.c.h.b16 %v189
    %v914 = vunpack.c.l.b16 %v190
    %v915 = vunpack.c.h.b16 %v190
    %v916 = vunpack.c.l.b16 %v191
    %v917 = vunpack.c.h.b16 %v191
    %v918 = vunpack.c.l.b16 %v192
    %v919 = vunpack.c.h.b16 %v192
    %v920 = vunpack.c.l.b16 %v193
    %v921 = vunpack.c.h.b16 %v193
    %v922 = vunpack.c.l.b16 %v194
    %v923 = vunpack.c.h.b16 %v194
    %v924 = vunpack.c.l.b16 %v195
    %v925 = vunpack.c.h.b16 %v195
    %v926 = vunpack.c.l.b16 %v196
    %v927 = vunpack.c.h.b16 %v196
    %v928 = vunpack.c.l.b16 %v197
    %v929 = vunpack.c.h.b16 %v197
    %v930 = vunpack.c.l.b16 %v198
    %v931 = vunpack.c.h.b16 %v198
    %v932 = vunpack.c.l.b16 %v199
    %v933 = vunpack.c.h.b16 %v199
    %v934 = vunpack.c.l.b16 %v200
    %v935 = vunpack.c.h.b16 %v200
    %v936 = vunpack.c.l.b16 %v201
    %v937 = vunpack.c.h.b16 %v201
    %v938 = vunpack.c.l.b16 %v202
    %v939 = vunpack.c.h.b16 %v202
    %v940 = vunpack.c.l.b16 %v203
    %v941 = vunpack.c.h.b16 %v203
    %v942 = vunpack.c.l.b16 %v204
    %v943 = vunpack.c.h.b16 %v204
    %v944 = vunpack.c.l.b16 %v205
    %v945 = vunpack.c.h.b16 %v205
    %v946 = vunpack.c.l.b16 %v206
    %v947 = vunpack.c.h.b16 %v206
    %v948 = vunpack.c.l.b16 %v207
    %v949 = vunpack.c.h.b16 %v207
    %v950 = vunpack.c.l.b16 %v208
    %v951 = vunpack.c.h.b16 %v208
    %v952 = vunpack.c.l.b16 %v209
    %v953 = vunpack.c.h.b16 %v209
    %v954 = vunpack.c.l.b16 %v210
    %v955 = vunpack.c.h.b16 %v210
    %v956 = vunpack.c.l.b16 %v211
    %v957 = vunpack.c.h.b16 %v211
    %v958 = vunpack.c.l.b16 %v212
    %v959 = vunpack.c.h.b16 %v212
    %v960 = vunpack.c.l.b16 %v213
    %v961 = vunpack.c.h.b16 %v213
    %v962 = vunpack.c.l.b16 %v214
    %v963 = vunpack.c.h.b16 %v214
    %v964 = vunpack.c.l.b16 %v215
    %v965 = vunpack.c.h.b16 %v215
    %v966 = vunpack.c.l.b16 %v216
    %v967 = vunpack.c.h.b16 %v216
    %v968 = vunpack.c.l.b16 %v217
    %v969 = vunpack.c.h.b16 %v217
    %v970 = vunpack.c.l.b16 %v218
    %v971 = vunpack.c.h.b16 %v218
    %v972 = vunpack.c.l.b16 %v219
    %v973 = vunpack.c.h.b16 %v219
    %v974 = vunpack.c.l.b16 %v220
    %v975 = vunpack.c.h.b16 %v220
    %v976 = vunpack.c.l.b16 %v221
    %v977 = vunpack.c.h.b16 %v221
    %v978 = vunpack.c.l.b16 %v222
    %v979 = vunpack.c.h.b16 %v222
    %v980 = vunpack.c.l.b16 %v223
    %v981 = vunpack.c.h.b16 %v223
    %v982 = vunpack.c.l.b16 %v224
    %v983 = vunpack.c.h.b16 %v224
    %v984 = vunpack.c.l.b16 %v225
    %v985 = vunpack.c.h.b16 %v225
    %v986 = vunpack.c.l.b16 %v226
    %v987 = vunpack.c.h.b16 %v226
    %v988 = vunpack.c.l.b16 %v227
    %v989 = vunpack.c.h.b16 %v227
    %v990 = vunpack.c.l.b16 %v228
    %v991 = vunpack.c.h.b16 %v228
    %v992 = vunpack.c.l.b16 %v229
    %v993 = vunpack.c.h.b16 %v229
    %v994 = vunpack.c.l.b16 %v230
    %v995 = vunpack.c.h.b16 %v230
    %v996 = vunpack.c.l.b16 %v231
    %v997 = vunpack.c.h.b16 %v231
    %v998 = vunpack.c.l.b16 %v232
    %v999 = vunpack.c.h.b16 %v232
    %v1000 = vunpack.c.l.b16 %v233
    %v1001 = vunpack.c.h.b16 %v233
    %v1002 = vunpack.c.l.b16 %v234
    %v1003 = vunpack.c.h.b16 %v234
    %v1004 = vunpack.c.l.b16 %v235
    %v1005 = vunpack.c.h.b16 %v235
    %v1006 = vunpack.c.l.b16 %v236
    %v1007 = vunpack.c.h.b16 %v236
    %v1008 = vunpack.c.l.b16 %v237
    %v1009 = vunpack.c.h.b16 %v237
    %v1010 = vunpack.c.l.b16 %v238
    %v1011 = vunpack.c.h.b16 %v238
    %v1012 = vunpack.c.l.b16 %v239
    %v1013 = vunpack.c.h.b16 %v239
    %v1014 = vunpack.c.l.b16 %v240
    %v1015 = vunpack.c.h.b16 %v240
    %v1016 = vunpack.c.l.b16 %v241
    %v1017 = vunpack.c.h.b16 %v241
    %v1018 = vunpack.c.l.b16 %v242
    %v1019 = vunpack.c.h.b16 %v242
    %v1020 = vunpack.c.l.b16 %v243
    %v1021 = vunpack.c.h.b16 %v243
    %v1022 = vunpack.c.l.b16 %v244
    %v1023 = vunpack.c.h.b16 %v244
    %v1024 = vunpack.c.l.b16 %v245
    %v1025 = vunpack.c.h.b16 %v245
    %v1026 = vunpack.c.l.b16 %v246
    %v1027 = vunpack.c.h.b16 %v246
    %v1028 = vunpack.c.l.b16 %v247
    %v1029 = vunpack.c.h.b16 %v247
    %v1030 = vunpack.c.l.b16 %v248
    %v1031 = vunpack.c.h.b16 %v248
    %v1032 = vunpack.c.l.b16 %v249
    %v1033 = vunpack.c.h.b16 %v249
    %v1034 = vunpack.c.l.b16 %v250
    %v1035 = vunpack.c.h.b16 %v250
    %v1036 = vunpack.c.l.b16 %v251
    %v1037 = vunpack.c.h.b16 %v251
    %v1038 = vunpack.c.l.b16 %v252
    %v1039 = vunpack.c.h.b16 %v252
    %v1040 = vunpack.c.l.b16 %v253
    %v1041 = vunpack.c.h.b16 %v253
    %v1042 = vunpack.c.l.b16 %v254
    %v1043 = vunpack.c.h.b16 %v254
    %v1044 = vunpack.c.l.b16 %v255
    %v1045 = vunpack.c.h.b16 %v255
    %v1046 = vunpack.c.l.b16 %v256
    %v1047 = vunpack.c.h.b16 %v256
    %v1048 = vunpack.c.l.b16 %v257
    %v1049 = vunpack.c.h.b16 %v257
    %v1050 = vunpack.c.l.b16 %v258
    %v1051 = vunpack.c.h.b16 %v258
    %v1052 = vunpack.c.l.b16 %v259
    %v1053 = vunpack.c.h.b16 %v259
    %v1054 = vunpack.c.l.b16 %v260
    %v1055 = vunpack.c.h.b16 %v260
    %v1056 = vunpack.c.l.b16 %v261
    %v1057 = vunpack.c.h.b16 %v261
    %v1058 = vunpack.c.l.b16 %v262
    %v1059 = vunpack.c.h.b16 %v262
    %v1060 = vunpack.c.l.b16 %v263
    %v1061 = vunpack.c.h.b16 %v263
    %v1062 = vunpack.c.l.b16 %v264
    %v1063 = vunpack.c.h.b16 %v264
    %v1064 = vunpack.c.l.b16 %v265
    %v1065 = vunpack.c.h.b16 %v265
    %v1066 = vunpack.c.l.b16 %v266
    %v1067 = vunpack.c.h.b16 %v266
    %v1068 = vunpack.c.l.b16 %v267
    %v1069 = vunpack.c.h.b16 %v267
    %v1070 = vunpack.c.l.b16 %v268
    %v1071 = vunpack.c.h.b16 %v268
    %v1072 = vunpack.c.l.b16 %v269
    %v1073 = vunpack.c.h.b16 %v269
    %v1074 = vunpack.c.l.b16 %v270
    %v1075 = vunpack.c.h.b16 %v270
    %v1076 = vunpack.c.l.b16 %v271
    %v1077 = vunpack.c.h.b16 %v271
    %v1078 = vunpack.c.l.b16 %v272
    %v1079 = vunpack.c.h.b16 %v272
    %v1080 = vunpack.c.l.b16 %v273
    %v1081 = vunpack.c.h.b16 %v273
    %v1082 = vunpack.c.l.b16 %v274
    %v1083 = vunpack.c.h.b16 %v274
    %v1084 = vunpack.c.l.b16 %v275
    %v1085 = vunpack.c.h.b16 %v275
    %v1086 = vunpack.c.l.b16 %v276
    %v1087 = vunpack.c.h.b16 %v276
    %v1088 = vunpack.c.l.b16 %v277
    %v1089 = vunpack.c.h.b16 %v277
    %v1090 = vunpack.c.l.b16 %v278
    %v1091 = vunpack.c.h.b16 %v278
    %v1092 = vunpack.c.l.b16 %v279
    %v1093 = vunpack.c.h.b16 %v279
    %v1094 = vunpack.c.l.b16 %v280
    %v1095 = vunpack.c.h.b16 %v280
    %v1096 = vunpack.c.l.b16 %v281
    %v1097 = vunpack.c.h.b16 %v281
    %v1098 = vunpack.c.l.b16 %v282
    %v1099 = vunpack.c.h.b16 %v282
    %v1100 = vunpack.c.l.b16 %v283
    %v1101 = vunpack.c.h.b16 %v283
    %v1102 = vunpack.c.l.b16 %v284
    %v1103 = vunpack.c.h.b16 %v284
    %v1104 = vunpack.c.l.b16 %v285
    %v1105 = vunpack.c.h.b16 %v285
    %v1106 = vunpack.c.l.b16 %v286
    %v1107 = vunpack.c.h.b16 %v286
    %v1108 = vunpack.c.l.b16 %v287
    %v1109 = vunpack.c.h.b16 %v287
    %v1110 = vunpack.c.l.b16 %v288
    %v1111 = vunpack.c.h.b16 %v288
    %v1112 = vunpack.c.l.b16 %v289
    %v1113 = vunpack.c.h.b16 %v289
    %v1114 = vunpack.c.l.b16 %v290
    %v1115 = vunpack.c.h.b16 %v290
    %v1116 = vunpack.c.l.b16 %v291
    %v1117 = vunpack.c.h.b16 %v291
    %v1118 = vunpack.c.l.b16 %v292
    %v1119 = vunpack.c.h.b16 %v292
    %v1120 = vunpack.c.l.b16 %v293
    %v1121 = vunpack.c.h.b16 %v293
    %v1122 = vunpack.c.l.b16 %v294
    %v1123 = vunpack.c.h.b16 %v294
    %v1124 = vunpack.c.l.b16 %v295
    %v1125 = vunpack.c.h.b16 %v295
    %v1126 = vunpack.c.l.b16 %v296
    %v1127 = vunpack.c.h.b16 %v296
    %v1128 = vunpack.c.l.b16 %v297
    %v1129 = vunpack.c.h.b16 %v297
    %v1130 = vunpack.c.l.b16 %v298
    %v1131 = vunpack.c.h.b16 %v298
    %v1132 = vunpack.c.l.b16 %v299
    %v1133 = vunpack.c.h.b16 %v299
    %v1134 = vunpack.c.l.b16 %v300
    %v1135 = vunpack.c.h.b16 %v300
    %v1136 = vunpack.c.l.b16 %v301
    %v1137 = vunpack.c.h.b16 %v301
    %v1138 = vunpack.c.l.b16 %v302
    %v1139 = vunpack.c.h.b16 %v302
    %v1140 = vunpack.c.l.b16 %v303
    %v1141 = vunpack.c.h.b16 %v303
    %v1142 = vunpack.c.l.b16 %v304
    %v1143 = vunpack.c.h.b16 %v304
    %v1144 = vunpack.c.l.b16 %v305
    %v1145 = vunpack.c.h.b16 %v305
    %v1146 = vunpack.c.l.b16 %v306
    %v1147 = vunpack.c.h.b16 %v306
    %v1148 = vunpack.c.l.b16 %v307
    %v1149 = vunpack.c.h.b16 %v307
    %v1150 = vunpack.c.l.b16 %v308
    %v1151 = vunpack.c.h.b16 %v308
    %v1152 = vunpack.c.l.b16 %v309
    %v1153 = vunpack.c.h.b16 %v309
    %v1154 = vunpack.c.l.b16 %v310
    %v1155 = vunpack.c.h.b16 %v310
    %v1156 = vunpack.c.l.b16 %v311
    %v1157 = vunpack.c.h.b16 %v311
    %v1158 = vunpack.c.l.b16 %v312
    %v1159 = vunpack.c.h.b16 %v312
    %v1160 = vunpack.c.l.b16 %v313
    %v1161 = vunpack.c.h.b16 %v313
    %v1162 = vunpack.c.l.b16 %v314
    %v1163 = vunpack.c.h.b16 %v314
    %v1164 = vunpack.c.l.b16 %v315
    %v1165 = vunpack.c.h.b16 %v315
    %v1166 = vunpack.c.l.b16 %v316
    %v1167 = vunpack.c.h.b16 %v316
    %v1168 = vunpack.c.l.b16 %v317
    %v1169 = vunpack.c.h.b16 %v317
    %v1170 = vunpack.c.l.b16 %v318
    %v1171 = vunpack.c.h.b16 %v318
    %v1172 = vunpack.c.l.b16 %v319
    %v1173 = vunpack.c.h.b16 %v319
    %v1174 = vunpack.c.l.b16 %v320
    %v1175 = vunpack.c.h.b16 %v320
    %v1176 = vunpack.c.l.b16 %v321
    %v1177 = vunpack.c.h.b16 %v321
    %v1178 = vunpack.c.l.b16 %v322
    %v1179 = vunpack.c.h.b16 %v322
    %v1180 = vunpack.c.l.b16 %v323
    %v1181 = vunpack.c.h.b16 %v323
    %v1182 = vunpack.c.l.b16 %v324
    %v1183 = vunpack.c.h.b16 %v324
    %v1184 = vunpack.c.l.b16 %v325
    %v1185 = vunpack.c.h.b16 %v325
    %v1186 = vunpack.c.l.b16 %v326
    %v1187 = vunpack.c.h.b16 %v326
    %v1188 = vunpack.c.l.b16 %v327
    %v1189 = vunpack.c.h.b16 %v327
    %v1190 = vunpack.c.l.b16 %v328
    %v1191 = vunpack.c.h.b16 %v328
    %v1192 = vunpack.c.l.b16 %v329
    %v1193 = vunpack.c.h.b16 %v329
    %v1194 = vunpack.c.l.b16 %v330
    %v1195 = vunpack.c.h.b16 %v330
    %v1196 = vunpack.c.l.b16 %v331
    %v1197 = vunpack.c.h.b16 %v331
    %v1198 = vunpack.c.l.b16 %v332
    %v1199 = vunpack.c.h.b16 %v332
    %v1200 = vunpack.c.l.b16 %v333
    %v1201 = vunpack.c.h.b16 %v333
    %v1202 = vunpack.c.l.b16 %v334
    %v1203 = vunpack.c.h.b16 %v334
    %v1204 = vunpack.c.l.b16 %v335
    %v1205 = vunpack.c.h.b16 %v335
    %v1206 = vunpack.c.l.b16 %v336
    %v1207 = vunpack.c.h.b16 %v336
    %v1208 = vunpack.c.l.b16 %v337
    %v1209 = vunpack.c.h.b16 %v337
    %v1210 = vunpack.c.l.b16 %v338
    %v1211 = vunpack.c.h.b16 %v338
    %v1212 = vunpack.c.l.b16 %v339
    %v1213 = vunpack.c.h.b16 %v339
    %v1214 = vunpack.c.l.b16 %v340
    %v1215 = vunpack.c.h.b16 %v340
    %v1216 = vunpack.c.l.b16 %v341
    %v1217 = vunpack.c.h.b16 %v341
    %v1218 = vunpack.c.l.b16 %v342
    %v1219 = vunpack.c.h.b16 %v342
    %v1220 = vunpack.c.l.b16 %v343
    %v1221 = vunpack.c.h.b16 %v343
    %v1222 = vpack.c.b16 %v652, %v646
    %v1223 = vpack.c.b16 %v653, %v647
    %v1224 = vpack.c.b16 %v654, %v648
    %v1225 = vpack.c.b16 %v655, %v649
    %v1226 = vpack.c.b16 %v656, %v650
    %v1227 = vpack.c.b16 %v657, %v651
    %v1228 = vpack.c.b16 %v664, %v658
    %v1229 = vpack.c.b16 %v665, %v659
    %v1230 = vpack.c.b16 %v666, %v660
    %v1231 = vpack.c.b16 %v667, %v661
    %v1232 = vpack.c.b16 %v668, %v662
    %v1233 = vpack.c.b16 %v669, %v663
    %v1234 = vpack.c.b16 %v676, %v670
    %v1235 = vpack.c.b16 %v677, %v671
    %v1236 = vpack.c.b16 %v678, %v672
    %v1237 = vpack.c.b16 %v679, %v673
    %v1238 = vpack.c.b16 %v680, %v674
    %v1239 = vpack.c.b16 %v681, %v675
    %v1240 = vpack.c.b16 %v688, %v682
    %v1241 = vpack.c.b16 %v689, %v683
    %v1242 = vpack.c.b16 %v690, %v684
    %v1243 = vpack.c.b16 %v691, %v685
    %v1244 = vpack.c.b16 %v692, %v686
    %v1245 = vpack.c.b16 %v693, %v687
    %v1246 = vpack.c.b16 %v700, %v694
    %v1247 = vpack.c.b16 %v701, %v695
    %v1248 = vpack.c.b16 %v702, %v696
    %v1249 = vpack.c.b16 %v703, %v697
    %v1250 = vpack.c.b16 %v704, %v698
    %v1251 = vpack.c.b16 %v705, %v699
    %v1252 = vpack.c.b16 %v712, %v706
    %v1253 = vpack.c.b16 %v713, %v707
    %v1254 = vpack.c.b16 %v714, %v708
    %v1255 = vpack.c.b16 %v715, %v709
    %v1256 = vpack.c.b16 %v716, %v710
    %v1257 = vpack.c.b16 %v717, %v711
    %v1258 = vpack.c.b16 %v724, %v718
    %v1259 = vpack.c.b16 %v725, %v719
    %v1260 = vpack.c.b16 %v726, %v720
    %v1261 = vpack.c.b16 %v727, %v721
    %v1262 = vpack.c.b16 %v728, %v722
    %v1263 = vpack.c.b16 %v729, %v723
    %v1264 = vpack.c.b16 %v736, %v730
    %v1265 = vpack.c.b16 %v737, %v731
    %v1266 = vpack.c.b16 %v738, %v732
    %v1267 = vpack.c.b16 %v739, %v733
    %v1268 = vpack.c.b16 %v740, %v734
    %v1269 = vpack.c.b16 %v741, %v735
    %v1270 = vpack.c.b16 %v748, %v742
    %v1271 = vpack.c.b16 %v749, %v743
    %v1272 = vpack.c.b16 %v750, %v744
    %v1273 = vpack.c.b16 %v751, %v745
    %v1274 = vpack.c.b16 %v752, %v746
    %v1275 = vpack.c.b16 %v753, %v747
    %v1276 = vpack.c.b16 %v760, %v754
    %v1277 = vpack.c.b16 %v761, %v755
    %v1278 = vpack.c.b16 %v762, %v756
    %v1279 = vpack.c.b16 %v763, %v757
    %v1280 = vpack.c.b16 %v764, %v758
    %v1281 = vpack.c.b16 %v765, %v759
    %v1282 = vpack.c.b16 %v772, %v766
    %v1283 = vpack.c.b16 %v773, %v767
    %v1284 = vpack.c.b16 %v774, %v768
    %v1285 = vpack.c.b16 %v775, %v769
    %v1286 = vpack.c.b16 %v776, %v770
    %v1287 = vpack.c.b16 %v777, %v771
    %v1288 = vpack.c.b16 %v784, %v778
    %v1289 = vpack.c.b16 %v785, %v779
    %v1290 = vpack.c.b16 %v786, %v780
    %v1291 = vpack.c.b16 %v787, %v781
    %v1292 = vpack.c.b16 %v788, %v782
    %v1293 = vpack.c.b16 %v789, %v783
    %v1294 = vpack.c.b16 %v796, %v790
    %v1295 = vpack.c.b16 %v797, %v791
    %v1296 = vpack.c.b16 %v798, %v792
    %v1297 = vpack.c.b16 %v799, %v793
    %v1298 = vpack.c.b16 %v800, %v794
    %v1299 = vpack.c.b16 %v801, %v795
    %v1300 = vpack.c.b16 %v808, %v802
    %v1301 = vpack.c.b16 %v809, %v803
    %v1302 = vpack.c.b16 %v810, %v804
    %v1303 = vpack.c.b16 %v811, %v805
    %v1304 = vpack.c.b16 %v812, %v806
    %v1305 = vpack.c.b16 %v813, %v807
    %v1306 = vpack.c.b16 %v820, %v814
    %v1307 = vpack.c.b16 %v821, %v815
    %v1308 = vpack.c.b16 %v822, %v816
    %v1309 = vpack.c.b16 %v823, %v817
    %v1310 = vpack.c.b16 %v824, %v818
    %v1311 = vpack.c.b16 %v825, %v819
    %v1312 = vpack.c.b16 %v832, %v826
    %v1313 = vpack.c.b16 %v833, %v827
    %v1314 = vpack.c.b16 %v834, %v828
    %v1315 = vpack.c.b16 %v835, %v829
    %v1316 = vpack.c.b16 %v836, %v830
    %v1317 = vpack.c.b16 %v837, %v831
    %v1318 = vpack.c.b16 %v844, %v838
    %v1319 = vpack.c.b16 %v845, %v839
    %v1320 = vpack.c.b16 %v846, %v840
    %v1321 = vpack.c.b16 %v847, %v841
    %v1322 = vpack.c.b16 %v848, %v842
    %v1323 = vpack.c.b16 %v849, %v843
    %v1324 = vpack.c.b16 %v856, %v850
    %v1325 = vpack.c.b16 %v857, %v851
    %v1326 = vpack.c.b16 %v858, %v852
    %v1327 = vpack.c.b16 %v859, %v853
    %v1328 = vpack.c.b16 %v860, %v854
    %v1329 = vpack.c.b16 %v861, %v855
    %v1330 = vpack.c.b16 %v868, %v862
    %v1331 = vpack.c.b16 %v869, %v863
    %v1332 = vpack.c.b16 %v870, %v864
    %v1333 = vpack.c.b16 %v871, %v865
    %v1334 = vpack.c.b16 %v872, %v866
    %v1335 = vpack.c.b16 %v873, %v867
    %v1336 = vpack.c.b16 %v880, %v874
    %v1337 = vpack.c.b16 %v881, %v875
    %v1338 = vpack.c.b16 %v882, %v876
    %v1339 = vpack.c.b16 %v883, %v877
    %v1340 = vpack.c.b16 %v884, %v878
    %v1341 = vpack.c.b16 %v885, %v879
    %v1342 = vpack.c.b16 %v892, %v886
    %v1343 = vpack.c.b16 %v893, %v887
    %v1344 = vpack.c.b16 %v894, %v888
    %v1345 = vpack.c.b16 %v895, %v889
    %v1346 = vpack.c.b16 %v896, %v890
    %v1347 = vpack.c.b16 %v897, %v891
    %v1348 = vpack.c.b16 %v904, %v898
    %v1349 = vpack.c.b16 %v905, %v899
    %v1350 = vpack.c.b16 %v906, %v900
    %v1351 = vpack.c.b16 %v907, %v901
    %v1352 = vpack.c.b16 %v908, %v902
    %v1353 = vpack.c.b16 %v909, %v903
    %v1354 = vpack.c.b16 %v916, %v910
    %v1355 = vpack.c.b16 %v917, %v911
    %v1356 = vpack.c.b16 %v918, %v912
    %v1357 = vpack.c.b16 %v919, %v913
    %v1358 = vpack.c.b16 %v920, %v914
    %v1359 = vpack.c.b16 %v921, %v915
    %v1360 = vpack.c.b16 %v928, %v922
    %v1361 = vpack.c.b16 %v929, %v923
    %v1362 = vpack.c.b16 %v930, %v924
    %v1363 = vpack.c.b16 %v931, %v925
    %v1364 = vpack.c.b16 %v932, %v926
    %v1365 = vpack.c.b16 %v933, %v927
    %v1366 = vpack.c.b16 %v940, %v934
    %v1367 = vpack.c.b16 %v941, %v935
    %v1368 = vpack.c.b16 %v942, %v936
    %v1369 = vpack.c.b16 %v943, %v937
    %v1370 = vpack.c.b16 %v944, %v938
    %v1371 = vpack.c.b16 %v945, %v939
    %v1372 = vpack.c.b16 %v952, %v946
    %v1373 = vpack.c.b16 %v953, %v947
    %v1374 = vpack.c.b16 %v954, %v948
    %v1375 = vpack.c.b16 %v955, %v949
    %v1376 = vpack.c.b16 %v956, %v950
    %v1377 = vpack.c.b16 %v957, %v951
    %v1378 = vpack.c.b16 %v964, %v958
    %v1379 = vpack.c.b16 %v965, %v959
    %v1380 = vpack.c.b16 %v966, %v960
    %v1381 = vpack.c.b16 %v967, %v961
    %v1382 = vpack.c.b16 %v968, %v962
    %v1383 = vpack.c.b16 %v969, %v963
    %v1384 = vpack.c.b16 %v976, %v970
    %v1385 = vpack.c.b16 %v977, %v971
    %v1386 = vpack.c.b16 %v978, %v972
    %v1387 = vpack.c.b16 %v979, %v973
    %v1388 = vpack.c.b16 %v980, %v974
    %v1389 = vpack.c.b16 %v981, %v975
    %v1390 = vpack.c.b16 %v988, %v982
    %v1391 = vpack.c.b16 %v989, %v983
    %v1392 = vpack.c.b16 %v990, %v984
    %v1393 = vpack.c.b16 %v991, %v985
    %v1394 = vpack.c.b16 %v992, %v986
    %v1395 = vpack.c.b16 %v993, %v987
    %v1396 = vpack.c.b16 %v1000, %v994
    %v1397 = vpack.c.b16 %v1001, %v995
    %v1398 = vpack.c.b16 %v1002, %v996
    %v1399 = vpack.c.b16 %v1003, %v997
    %v1400 = vpack.c.b16 %v1004, %v998
    %v1401 = vpack.c.b16 %v1005, %v999
    %v1402 = vpack.c.b16 %v1012, %v1006
    %v1403 = vpack.c.b16 %v1013, %v1007
    %v1404 = vpack.c.b16 %v1014, %v1008
    %v1405 = vpack.c.b16 %v1015, %v1009
    %v1406 = vpack.c.b16 %v1016, %v1010
    %v1407 = vpack.c.b16 %v1017, %v1011
    %v1408 = vpack.c.b16 %v1024, %v1018
    %v1409 = vpack.c.b16 %v1025, %v1019
    %v1410 = vpack.c.b16 %v1026, %v1020
    %v1411 = vpack.c.b16 %v1027, %v1021
    %v1412 = vpack.c.b16 %v1028, %v1022
    %v1413 = vpack.c.b16 %v1029, %v1023
    %v1414 = vpack.c.b16 %v1036, %v1030
    %v1415 = vpack.c.b16 %v1037, %v1031
    %v1416 = vpack.c.b16 %v1038, %v1032
    %v1417 = vpack.c.b16 %v1039, %v1033
    %v1418 = vpack.c.b16 %v1040, %v1034
    %v1419 = vpack.c.b16 %v1041, %v1035
    %v1420 = vpack.c.b16 %v1048, %v1042
    %v1421 = vpack.c.b16 %v1049, %v1043
    %v1422 = vpack.c.b16 %v1050, %v1044
    %v1423 = vpack.c.b16 %v1051, %v1045
    %v1424 = vpack.c.b16 %v1052, %v1046
    %v1425 = vpack.c.b16 %v1053, %v1047
    %v1426 = vpack.c.b16 %v1060, %v1054
    %v1427 = vpack.c.b16 %v1061, %v1055
    %v1428 = vpack.c.b16 %v1062, %v1056
    %v1429 = vpack.c.b16 %v1063, %v1057
    %v1430 = vpack.c.b16 %v1064, %v1058
    %v1431 = vpack.c.b16 %v1065, %v1059
    %v1432 = vpack.c.b16 %v1072, %v1066
    %v1433 = vpack.c.b16 %v1073, %v1067
    %v1434 = vpack.c.b16 %v1074, %v1068
    %v1435 = vpack.c.b16 %v1075, %v1069
    %v1436 = vpack.c.b16 %v1076, %v1070
    %v1437 = vpack.c.b16 %v1077, %v1071
    %v1438 = vpack.c.b16 %v1084, %v1078
    %v1439 = vpack.c.b16 %v1085, %v1079
    %v1440 = vpack.c.b16 %v1086, %v1080
    %v1441 = vpack.c.b16 %v1087, %v1081
    %v1442 = vpack.c.b16 %v1088, %v1082
    %v1443 = vpack.c.b16 %v1089, %v1083
    %v1444 = vpack.c.b16 %v1096, %v1090
    %v1445 = vpack.c.b16 %v1097, %v1091
    %v1446 = vpack.c.b16 %v1098, %v1092
    %v1447 = vpack.c.b16 %v1099, %v1093
    %v1448 = vpack.c.b16 %v1100, %v1094
    %v1449 = vpack.c.b16 %v1101, %v1095
    %v1450 = vpack.c.b16 %v1108, %v1102
    %v1451 = vpack.c.b16 %v1109, %v1103
    %v1452 = vpack.c.b16 %v1110, %v1104
    %v1453 = vpack.c.b16 %v1111, %v1105
    %v1454 = vpack.c.b16 %v1112, %v1106
    %v1455 = vpack.c.b16 %v1113, %v1107
    %v1456 = vpack.c.b16 %v1120, %v1114
    %v1457 = vpack.c.b16 %v1121, %v1115
    %v1458 = vpack.c.b16 %v1122, %v1116
    %v1459 = vpack.c.b16 %v1123, %v1117
    %v1460 = vpack.c.b16 %v1124, %v1118
    %v1461 = vpack.c.b16 %v1125, %v1119
    %v1462 = vpack.c.b16 %v1132, %v1126
    %v1463 = vpack.c.b16 %v1133, %v1127
    %v1464 = vpack.c.b16 %v1134, %v1128
    %v1465 = vpack.c.b16 %v1135, %v1129
    %v1466 = vpack.c.b16 %v1136, %v1130
    %v1467 = vpack.c.b16 %v1137, %v1131
    %v1468 = vpack.c.b16 %v1144, %v1138
    %v1469 = vpack.c.b16 %v1145, %v1139
    %v1470 = vpack.c.b16 %v1146, %v1140
    %v1471 = vpack.c.b16 %v1147, %v1141
    %v1472 = vpack.c.b16 %v1148, %v1142
    %v1473 = vpack.c.b16 %v1149, %v1143
    %v1474 = vpack.c.b16 %v1156, %v1150
    %v1475 = vpack.c.b16 %v1157, %v1151
    %v1476 = vpack.c.b16 %v1158, %v1152
    %v1477 = vpack.c.b16 %v1159, %v1153
    %v1478 = vpack.c.b16 %v1160, %v1154
    %v1479 = vpack.c.b16 %v1161, %v1155
    %v1480 = vpack.c.b16 %v1168, %v1162
    %v1481 = vpack.c.b16 %v1169, %v1163
    %v1482 = vpack.c.b16 %v1170, %v1164
    %v1483 = vpack.c.b16 %v1171, %v1165
    %v1484 = vpack.c.b16 %v1172, %v1166
    %v1485 = vpack.c.b16 %v1173, %v1167
    %v1486 = vpack.c.b16 %v1180, %v1174
    %v1487 = vpack.c.b16 %v1181, %v1175
    %v1488 = vpack.c.b16 %v1182, %v1176
    %v1489 = vpack.c.b16 %v1183, %v1177
    %v1490 = vpack.c.b16 %v1184, %v1178
    %v1491 = vpack.c.b16 %v1185, %v1179
    %v1492 = vpack.c.b16 %v1192, %v1186
    %v1493 = vpack.c.b16 %v1193, %v1187
    %v1494 = vpack.c.b16 %v1194, %v1188
    %v1495 = vpack.c.b16 %v1195, %v1189
    %v1496 = vpack.c.b16 %v1196, %v1190
    %v1497 = vpack.c.b16 %v1197, %v1191
    %v1498 = vpack.c.b16 %v1204, %v1198
    %v1499 = vpack.c.b16 %v1205, %v1199
    %v1500 = vpack.c.b16 %v1206, %v1200
    %v1501 = vpack.c.b16 %v1207, %v1201
    %v1502 = vpack.c.b16 %v1208, %v1202
    %v1503 = vpack.c.b16 %v1209, %v1203
    %v1504 = vpack.c.b16 %v1216, %v1210
    %v1505 = vpack.c.b16 %v1217, %v1211
    %v1506 = vpack.c.b16 %v1218, %v1212
    %v1507 = vpack.c.b16 %v1219, %v1213
    %v1508 = vpack.c.b16 %v1220, %v1214
    %v1509 = vpack.c.b16 %v1221, %v1215
    %1798 = vmatpush.bf16.msra.mxu0 %v1264
    %1799 = vmatpush.bf16.msra.mxu0 %v1258
    %1800 = vmatpush.bf16.msra.mxu0 %v1252
    %1801 = vmatpush.bf16.msra.mxu0 %v1246
    %1802 = vmatpush.bf16.msra.mxu0 %v1240
    %1803 = vmatpush.bf16.msra.mxu0 %v1234
    %1804 = vmatpush.bf16.msra.mxu0 %v1228
    %1805 = vmatpush.bf16.msra.mxu0 %v1222
    %1806 = vmatmul.bf16.gmra.mxu0 %v50
    %v1807 = vpop.f32.mrf.mxu0
    %v1808 = vadd.f32 %v346, %v1807
    %v1809 = vpop.f32.mrf.mxu0
    %1810 = vdwg.mxu0
    %1811 = vmatpush.bf16.msra.mxu0 %v1312
    %1812 = vmatpush.bf16.msra.mxu0 %v1306
    %1813 = vmatpush.bf16.msra.mxu0 %v1300
    %1814 = vmatpush.bf16.msra.mxu0 %v1294
    %1815 = vmatpush.bf16.msra.mxu0 %v1288
    %1816 = vmatpush.bf16.msra.mxu0 %v1282
    %1817 = vmatpush.bf16.msra.mxu0 %v1276
    %1818 = vmatpush.bf16.msra.mxu0 %v1270
    %1819 = vmatmul.bf16.gmra.mxu0 %v51
    %v1820 = vpop.f32.mrf.mxu0
    %v1821 = vadd.f32 %v1808, %v1820
    %v1822 = vpop.f32.mrf.mxu0
    %1823 = vdwg.mxu0
    %1824 = vmatpush.bf16.msra.mxu0 %v1360
    %1825 = vmatpush.bf16.msra.mxu0 %v1354
    %1826 = vmatpush.bf16.msra.mxu0 %v1348
    %1827 = vmatpush.bf16.msra.mxu0 %v1342
    %1828 = vmatpush.bf16.msra.mxu0 %v1336
    %1829 = vmatpush.bf16.msra.mxu0 %v1330
    %1830 = vmatpush.bf16.msra.mxu0 %v1324
    %1831 = vmatpush.bf16.msra.mxu0 %v1318
    %1832 = vmatmul.bf16.gmra.mxu0 %v52
    %v1833 = vpop.f32.mrf.mxu0
    %v1834 = vadd.f32 %v1821, %v1833
    %v1835 = vpop.f32.mrf.mxu0
    %1836 = vdwg.mxu0
    %1837 = vmatpush.bf16.msra.mxu0 %v1408
    %1838 = vmatpush.bf16.msra.mxu0 %v1402
    %1839 = vmatpush.bf16.msra.mxu0 %v1396
    %1840 = vmatpush.bf16.msra.mxu0 %v1390
    %1841 = vmatpush.bf16.msra.mxu0 %v1384
    %1842 = vmatpush.bf16.msra.mxu0 %v1378
    %1843 = vmatpush.bf16.msra.mxu0 %v1372
    %1844 = vmatpush.bf16.msra.mxu0 %v1366
    %1845 = vmatmul.bf16.gmra.mxu0 %v53
    %v1846 = vpop.f32.mrf.mxu0
    %v1847 = vadd.f32 %v1834, %v1846
    %v1848 = vpop.f32.mrf.mxu0
    %1849 = vdwg.mxu0
    %1850 = vmatpush.bf16.msra.mxu0 %v1456
    %1851 = vmatpush.bf16.msra.mxu0 %v1450
    %1852 = vmatpush.bf16.msra.mxu0 %v1444
    %1853 = vmatpush.bf16.msra.mxu0 %v1438
    %1854 = vmatpush.bf16.msra.mxu0 %v1432
    %1855 = vmatpush.bf16.msra.mxu0 %v1426
    %1856 = vmatpush.bf16.msra.mxu0 %v1420
    %1857 = vmatpush.bf16.msra.mxu0 %v1414
    %1858 = vmatmul.bf16.gmra.mxu0 %v54
    %v1859 = vpop.f32.mrf.mxu0
    %v1860 = vadd.f32 %v1847, %v1859
    %v1861 = vpop.f32.mrf.mxu0
    %1862 = vdwg.mxu0
    %1863 = vmatpush.bf16.msra.mxu0 %v1504
    %1864 = vmatpush.bf16.msra.mxu0 %v1498
    %1865 = vmatpush.bf16.msra.mxu0 %v1492
    %1866 = vmatpush.bf16.msra.mxu0 %v1486
    %1867 = vmatpush.bf16.msra.mxu0 %v1480
    %1868 = vmatpush.bf16.msra.mxu0 %v1474
    %1869 = vmatpush.bf16.msra.mxu0 %v1468
    %1870 = vmatpush.bf16.msra.mxu0 %v1462
    %1871 = vmatmul.bf16.gmra.mxu0 %v55
    %v1872 = vpop.f32.mrf.mxu0
    %v1873 = vadd.f32 %v1860, %v1872
    %v1874 = vpop.f32.mrf.mxu0
    %1875 = vdwg.mxu0
    %1876 = vmatpush.bf16.msra.mxu0 %v1265
    %1877 = vmatpush.bf16.msra.mxu0 %v1259
    %1878 = vmatpush.bf16.msra.mxu0 %v1253
    %1879 = vmatpush.bf16.msra.mxu0 %v1247
    %1880 = vmatpush.bf16.msra.mxu0 %v1241
    %1881 = vmatpush.bf16.msra.mxu0 %v1235
    %1882 = vmatpush.bf16.msra.mxu0 %v1229
    %1883 = vmatpush.bf16.msra.mxu0 %v1223
    %1884 = vmatmul.bf16.gmra.mxu0 %v50
    %v1885 = vpop.f32.mrf.mxu0
    %v1886 = vadd.f32 %v347, %v1885
    %v1887 = vpop.f32.mrf.mxu0
    %1888 = vdwg.mxu0
    %1889 = vmatpush.bf16.msra.mxu0 %v1313
    %1890 = vmatpush.bf16.msra.mxu0 %v1307
    %1891 = vmatpush.bf16.msra.mxu0 %v1301
    %1892 = vmatpush.bf16.msra.mxu0 %v1295
    %1893 = vmatpush.bf16.msra.mxu0 %v1289
    %1894 = vmatpush.bf16.msra.mxu0 %v1283
    %1895 = vmatpush.bf16.msra.mxu0 %v1277
    %1896 = vmatpush.bf16.msra.mxu0 %v1271
    %1897 = vmatmul.bf16.gmra.mxu0 %v51
    %v1898 = vpop.f32.mrf.mxu0
    %v1899 = vadd.f32 %v1886, %v1898
    %v1900 = vpop.f32.mrf.mxu0
    %1901 = vdwg.mxu0
    %1902 = vmatpush.bf16.msra.mxu0 %v1361
    %1903 = vmatpush.bf16.msra.mxu0 %v1355
    %1904 = vmatpush.bf16.msra.mxu0 %v1349
    %1905 = vmatpush.bf16.msra.mxu0 %v1343
    %1906 = vmatpush.bf16.msra.mxu0 %v1337
    %1907 = vmatpush.bf16.msra.mxu0 %v1331
    %1908 = vmatpush.bf16.msra.mxu0 %v1325
    %1909 = vmatpush.bf16.msra.mxu0 %v1319
    %1910 = vmatmul.bf16.gmra.mxu0 %v52
    %v1911 = vpop.f32.mrf.mxu0
    %v1912 = vadd.f32 %v1899, %v1911
    %v1913 = vpop.f32.mrf.mxu0
    %1914 = vdwg.mxu0
    %1915 = vmatpush.bf16.msra.mxu0 %v1409
    %1916 = vmatpush.bf16.msra.mxu0 %v1403
    %1917 = vmatpush.bf16.msra.mxu0 %v1397
    %1918 = vmatpush.bf16.msra.mxu0 %v1391
    %1919 = vmatpush.bf16.msra.mxu0 %v1385
    %1920 = vmatpush.bf16.msra.mxu0 %v1379
    %1921 = vmatpush.bf16.msra.mxu0 %v1373
    %1922 = vmatpush.bf16.msra.mxu0 %v1367
    %1923 = vmatmul.bf16.gmra.mxu0 %v53
    %v1924 = vpop.f32.mrf.mxu0
    %v1925 = vadd.f32 %v1912, %v1924
    %v1926 = vpop.f32.mrf.mxu0
    %1927 = vdwg.mxu0
    %1928 = vmatpush.bf16.msra.mxu0 %v1457
    %1929 = vmatpush.bf16.msra.mxu0 %v1451
    %1930 = vmatpush.bf16.msra.mxu0 %v1445
    %1931 = vmatpush.bf16.msra.mxu0 %v1439
    %1932 = vmatpush.bf16.msra.mxu0 %v1433
    %1933 = vmatpush.bf16.msra.mxu0 %v1427
    %1934 = vmatpush.bf16.msra.mxu0 %v1421
    %1935 = vmatpush.bf16.msra.mxu0 %v1415
    %1936 = vmatmul.bf16.gmra.mxu0 %v54
    %v1937 = vpop.f32.mrf.mxu0
    %v1938 = vadd.f32 %v1925, %v1937
    %v1939 = vpop.f32.mrf.mxu0
    %1940 = vdwg.mxu0
    %1941 = vmatpush.bf16.msra.mxu0 %v1505
    %1942 = vmatpush.bf16.msra.mxu0 %v1499
    %1943 = vmatpush.bf16.msra.mxu0 %v1493
    %1944 = vmatpush.bf16.msra.mxu0 %v1487
    %1945 = vmatpush.bf16.msra.mxu0 %v1481
    %1946 = vmatpush.bf16.msra.mxu0 %v1475
    %1947 = vmatpush.bf16.msra.mxu0 %v1469
    %1948 = vmatpush.bf16.msra.mxu0 %v1463
    %1949 = vmatmul.bf16.gmra.mxu0 %v55
    %v1950 = vpop.f32.mrf.mxu0
    %v1951 = vadd.f32 %v1938, %v1950
    %v1952 = vpop.f32.mrf.mxu0
    %1953 = vdwg.mxu0
    %1954 = vmatpush.bf16.msra.mxu0 %v1266
    %1955 = vmatpush.bf16.msra.mxu0 %v1260
    %1956 = vmatpush.bf16.msra.mxu0 %v1254
    %1957 = vmatpush.bf16.msra.mxu0 %v1248
    %1958 = vmatpush.bf16.msra.mxu0 %v1242
    %1959 = vmatpush.bf16.msra.mxu0 %v1236
    %1960 = vmatpush.bf16.msra.mxu0 %v1230
    %1961 = vmatpush.bf16.msra.mxu0 %v1224
    %1962 = vmatmul.bf16.gmra.mxu0 %v50
    %v1963 = vpop.f32.mrf.mxu0
    %v1964 = vadd.f32 %v348, %v1963
    %v1965 = vpop.f32.mrf.mxu0
    %1966 = vdwg.mxu0
    %1967 = vmatpush.bf16.msra.mxu0 %v1314
    %1968 = vmatpush.bf16.msra.mxu0 %v1308
    %1969 = vmatpush.bf16.msra.mxu0 %v1302
    %1970 = vmatpush.bf16.msra.mxu0 %v1296
    %1971 = vmatpush.bf16.msra.mxu0 %v1290
    %1972 = vmatpush.bf16.msra.mxu0 %v1284
    %1973 = vmatpush.bf16.msra.mxu0 %v1278
    %1974 = vmatpush.bf16.msra.mxu0 %v1272
    %1975 = vmatmul.bf16.gmra.mxu0 %v51
    %v1976 = vpop.f32.mrf.mxu0
    %v1977 = vadd.f32 %v1964, %v1976
    %v1978 = vpop.f32.mrf.mxu0
    %1979 = vdwg.mxu0
    %1980 = vmatpush.bf16.msra.mxu0 %v1362
    %1981 = vmatpush.bf16.msra.mxu0 %v1356
    %1982 = vmatpush.bf16.msra.mxu0 %v1350
    %1983 = vmatpush.bf16.msra.mxu0 %v1344
    %1984 = vmatpush.bf16.msra.mxu0 %v1338
    %1985 = vmatpush.bf16.msra.mxu0 %v1332
    %1986 = vmatpush.bf16.msra.mxu0 %v1326
    %1987 = vmatpush.bf16.msra.mxu0 %v1320
    %1988 = vmatmul.bf16.gmra.mxu0 %v52
    %v1989 = vpop.f32.mrf.mxu0
    %v1990 = vadd.f32 %v1977, %v1989
    %v1991 = vpop.f32.mrf.mxu0
    %1992 = vdwg.mxu0
    %1993 = vmatpush.bf16.msra.mxu0 %v1410
    %1994 = vmatpush.bf16.msra.mxu0 %v1404
    %1995 = vmatpush.bf16.msra.mxu0 %v1398
    %1996 = vmatpush.bf16.msra.mxu0 %v1392
    %1997 = vmatpush.bf16.msra.mxu0 %v1386
    %1998 = vmatpush.bf16.msra.mxu0 %v1380
    %1999 = vmatpush.bf16.msra.mxu0 %v1374
    %2000 = vmatpush.bf16.msra.mxu0 %v1368
    %2001 = vmatmul.bf16.gmra.mxu0 %v53
    %v2002 = vpop.f32.mrf.mxu0
    %v2003 = vadd.f32 %v1990, %v2002
    %v2004 = vpop.f32.mrf.mxu0
    %2005 = vdwg.mxu0
    %2006 = vmatpush.bf16.msra.mxu0 %v1458
    %2007 = vmatpush.bf16.msra.mxu0 %v1452
    %2008 = vmatpush.bf16.msra.mxu0 %v1446
    %2009 = vmatpush.bf16.msra.mxu0 %v1440
    %2010 = vmatpush.bf16.msra.mxu0 %v1434
    %2011 = vmatpush.bf16.msra.mxu0 %v1428
    %2012 = vmatpush.bf16.msra.mxu0 %v1422
    %2013 = vmatpush.bf16.msra.mxu0 %v1416
    %2014 = vmatmul.bf16.gmra.mxu0 %v54
    %v2015 = vpop.f32.mrf.mxu0
    %v2016 = vadd.f32 %v2003, %v2015
    %v2017 = vpop.f32.mrf.mxu0
    %2018 = vdwg.mxu0
    %2019 = vmatpush.bf16.msra.mxu0 %v1506
    %2020 = vmatpush.bf16.msra.mxu0 %v1500
    %2021 = vmatpush.bf16.msra.mxu0 %v1494
    %2022 = vmatpush.bf16.msra.mxu0 %v1488
    %2023 = vmatpush.bf16.msra.mxu0 %v1482
    %2024 = vmatpush.bf16.msra.mxu0 %v1476
    %2025 = vmatpush.bf16.msra.mxu0 %v1470
    %2026 = vmatpush.bf16.msra.mxu0 %v1464
    %2027 = vmatmul.bf16.gmra.mxu0 %v55
    %v2028 = vpop.f32.mrf.mxu0
    %v2029 = vadd.f32 %v2016, %v2028
    %v2030 = vpop.f32.mrf.mxu0
    %2031 = vdwg.mxu0
    %2032 = vmatpush.bf16.msra.mxu0 %v1267
    %2033 = vmatpush.bf16.msra.mxu0 %v1261
    %2034 = vmatpush.bf16.msra.mxu0 %v1255
    %2035 = vmatpush.bf16.msra.mxu0 %v1249
    %2036 = vmatpush.bf16.msra.mxu0 %v1243
    %2037 = vmatpush.bf16.msra.mxu0 %v1237
    %2038 = vmatpush.bf16.msra.mxu0 %v1231
    %2039 = vmatpush.bf16.msra.mxu0 %v1225
    %2040 = vmatmul.bf16.gmra.mxu0 %v50
    %v2041 = vpop.f32.mrf.mxu0
    %v2042 = vadd.f32 %v349, %v2041
    %v2043 = vpop.f32.mrf.mxu0
    %2044 = vdwg.mxu0
    %2045 = vmatpush.bf16.msra.mxu0 %v1315
    %2046 = vmatpush.bf16.msra.mxu0 %v1309
    %2047 = vmatpush.bf16.msra.mxu0 %v1303
    %2048 = vmatpush.bf16.msra.mxu0 %v1297
    %2049 = vmatpush.bf16.msra.mxu0 %v1291
    %2050 = vmatpush.bf16.msra.mxu0 %v1285
    %2051 = vmatpush.bf16.msra.mxu0 %v1279
    %2052 = vmatpush.bf16.msra.mxu0 %v1273
    %2053 = vmatmul.bf16.gmra.mxu0 %v51
    %v2054 = vpop.f32.mrf.mxu0
    %v2055 = vadd.f32 %v2042, %v2054
    %v2056 = vpop.f32.mrf.mxu0
    %2057 = vdwg.mxu0
    %2058 = vmatpush.bf16.msra.mxu0 %v1363
    %2059 = vmatpush.bf16.msra.mxu0 %v1357
    %2060 = vmatpush.bf16.msra.mxu0 %v1351
    %2061 = vmatpush.bf16.msra.mxu0 %v1345
    %2062 = vmatpush.bf16.msra.mxu0 %v1339
    %2063 = vmatpush.bf16.msra.mxu0 %v1333
    %2064 = vmatpush.bf16.msra.mxu0 %v1327
    %2065 = vmatpush.bf16.msra.mxu0 %v1321
    %2066 = vmatmul.bf16.gmra.mxu0 %v52
    %v2067 = vpop.f32.mrf.mxu0
    %v2068 = vadd.f32 %v2055, %v2067
    %v2069 = vpop.f32.mrf.mxu0
    %2070 = vdwg.mxu0
    %2071 = vmatpush.bf16.msra.mxu0 %v1411
    %2072 = vmatpush.bf16.msra.mxu0 %v1405
    %2073 = vmatpush.bf16.msra.mxu0 %v1399
    %2074 = vmatpush.bf16.msra.mxu0 %v1393
    %2075 = vmatpush.bf16.msra.mxu0 %v1387
    %2076 = vmatpush.bf16.msra.mxu0 %v1381
    %2077 = vmatpush.bf16.msra.mxu0 %v1375
    %2078 = vmatpush.bf16.msra.mxu0 %v1369
    %2079 = vmatmul.bf16.gmra.mxu0 %v53
    %v2080 = vpop.f32.mrf.mxu0
    %v2081 = vadd.f32 %v2068, %v2080
    %v2082 = vpop.f32.mrf.mxu0
    %2083 = vdwg.mxu0
    %2084 = vmatpush.bf16.msra.mxu0 %v1459
    %2085 = vmatpush.bf16.msra.mxu0 %v1453
    %2086 = vmatpush.bf16.msra.mxu0 %v1447
    %2087 = vmatpush.bf16.msra.mxu0 %v1441
    %2088 = vmatpush.bf16.msra.mxu0 %v1435
    %2089 = vmatpush.bf16.msra.mxu0 %v1429
    %2090 = vmatpush.bf16.msra.mxu0 %v1423
    %2091 = vmatpush.bf16.msra.mxu0 %v1417
    %2092 = vmatmul.bf16.gmra.mxu0 %v54
    %v2093 = vpop.f32.mrf.mxu0
    %v2094 = vadd.f32 %v2081, %v2093
    %v2095 = vpop.f32.mrf.mxu0
    %2096 = vdwg.mxu0
    %2097 = vmatpush.bf16.msra.mxu0 %v1507
    %2098 = vmatpush.bf16.msra.mxu0 %v1501
    %2099 = vmatpush.bf16.msra.mxu0 %v1495
    %2100 = vmatpush.bf16.msra.mxu0 %v1489
    %2101 = vmatpush.bf16.msra.mxu0 %v1483
    %2102 = vmatpush.bf16.msra.mxu0 %v1477
    %2103 = vmatpush.bf16.msra.mxu0 %v1471
    %2104 = vmatpush.bf16.msra.mxu0 %v1465
    %2105 = vmatmul.bf16.gmra.mxu0 %v55
    %v2106 = vpop.f32.mrf.mxu0
    %v2107 = vadd.f32 %v2094, %v2106
    %v2108 = vpop.f32.mrf.mxu0
    %2109 = vdwg.mxu0
    %2110 = vmatpush.bf16.msra.mxu0 %v1268
    %2111 = vmatpush.bf16.msra.mxu0 %v1262
    %2112 = vmatpush.bf16.msra.mxu0 %v1256
    %2113 = vmatpush.bf16.msra.mxu0 %v1250
    %2114 = vmatpush.bf16.msra.mxu0 %v1244
    %2115 = vmatpush.bf16.msra.mxu0 %v1238
    %2116 = vmatpush.bf16.msra.mxu0 %v1232
    %2117 = vmatpush.bf16.msra.mxu0 %v1226
    %2118 = vmatmul.bf16.gmra.mxu0 %v50
    %v2119 = vpop.f32.mrf.mxu0
    %v2120 = vadd.f32 %v350, %v2119
    %v2121 = vpop.f32.mrf.mxu0
    %2122 = vdwg.mxu0
    %2123 = vmatpush.bf16.msra.mxu0 %v1316
    %2124 = vmatpush.bf16.msra.mxu0 %v1310
    %2125 = vmatpush.bf16.msra.mxu0 %v1304
    %2126 = vmatpush.bf16.msra.mxu0 %v1298
    %2127 = vmatpush.bf16.msra.mxu0 %v1292
    %2128 = vmatpush.bf16.msra.mxu0 %v1286
    %2129 = vmatpush.bf16.msra.mxu0 %v1280
    %2130 = vmatpush.bf16.msra.mxu0 %v1274
    %2131 = vmatmul.bf16.gmra.mxu0 %v51
    %v2132 = vpop.f32.mrf.mxu0
    %v2133 = vadd.f32 %v2120, %v2132
    %v2134 = vpop.f32.mrf.mxu0
    %2135 = vdwg.mxu0
    %2136 = vmatpush.bf16.msra.mxu0 %v1364
    %2137 = vmatpush.bf16.msra.mxu0 %v1358
    %2138 = vmatpush.bf16.msra.mxu0 %v1352
    %2139 = vmatpush.bf16.msra.mxu0 %v1346
    %2140 = vmatpush.bf16.msra.mxu0 %v1340
    %2141 = vmatpush.bf16.msra.mxu0 %v1334
    %2142 = vmatpush.bf16.msra.mxu0 %v1328
    %2143 = vmatpush.bf16.msra.mxu0 %v1322
    %2144 = vmatmul.bf16.gmra.mxu0 %v52
    %v2145 = vpop.f32.mrf.mxu0
    %v2146 = vadd.f32 %v2133, %v2145
    %v2147 = vpop.f32.mrf.mxu0
    %2148 = vdwg.mxu0
    %2149 = vmatpush.bf16.msra.mxu0 %v1412
    %2150 = vmatpush.bf16.msra.mxu0 %v1406
    %2151 = vmatpush.bf16.msra.mxu0 %v1400
    %2152 = vmatpush.bf16.msra.mxu0 %v1394
    %2153 = vmatpush.bf16.msra.mxu0 %v1388
    %2154 = vmatpush.bf16.msra.mxu0 %v1382
    %2155 = vmatpush.bf16.msra.mxu0 %v1376
    %2156 = vmatpush.bf16.msra.mxu0 %v1370
    %2157 = vmatmul.bf16.gmra.mxu0 %v53
    %v2158 = vpop.f32.mrf.mxu0
    %v2159 = vadd.f32 %v2146, %v2158
    %v2160 = vpop.f32.mrf.mxu0
    %2161 = vdwg.mxu0
    %2162 = vmatpush.bf16.msra.mxu0 %v1460
    %2163 = vmatpush.bf16.msra.mxu0 %v1454
    %2164 = vmatpush.bf16.msra.mxu0 %v1448
    %2165 = vmatpush.bf16.msra.mxu0 %v1442
    %2166 = vmatpush.bf16.msra.mxu0 %v1436
    %2167 = vmatpush.bf16.msra.mxu0 %v1430
    %2168 = vmatpush.bf16.msra.mxu0 %v1424
    %2169 = vmatpush.bf16.msra.mxu0 %v1418
    %2170 = vmatmul.bf16.gmra.mxu0 %v54
    %v2171 = vpop.f32.mrf.mxu0
    %v2172 = vadd.f32 %v2159, %v2171
    %v2173 = vpop.f32.mrf.mxu0
    %2174 = vdwg.mxu0
    %2175 = vmatpush.bf16.msra.mxu0 %v1508
    %2176 = vmatpush.bf16.msra.mxu0 %v1502
    %2177 = vmatpush.bf16.msra.mxu0 %v1496
    %2178 = vmatpush.bf16.msra.mxu0 %v1490
    %2179 = vmatpush.bf16.msra.mxu0 %v1484
    %2180 = vmatpush.bf16.msra.mxu0 %v1478
    %2181 = vmatpush.bf16.msra.mxu0 %v1472
    %2182 = vmatpush.bf16.msra.mxu0 %v1466
    %2183 = vmatmul.bf16.gmra.mxu0 %v55
    %v2184 = vpop.f32.mrf.mxu0
    %v2185 = vadd.f32 %v2172, %v2184
    %v2186 = vpop.f32.mrf.mxu0
    %2187 = vdwg.mxu0
    %2188 = vmatpush.bf16.msra.mxu0 %v1269
    %2189 = vmatpush.bf16.msra.mxu0 %v1263
    %2190 = vmatpush.bf16.msra.mxu0 %v1257
    %2191 = vmatpush.bf16.msra.mxu0 %v1251
    %2192 = vmatpush.bf16.msra.mxu0 %v1245
    %2193 = vmatpush.bf16.msra.mxu0 %v1239
    %2194 = vmatpush.bf16.msra.mxu0 %v1233
    %2195 = vmatpush.bf16.msra.mxu0 %v1227
    %2196 = vmatmul.bf16.gmra.mxu0 %v50
    %v2197 = vpop.f32.mrf.mxu0
    %v2198 = vadd.f32 %v351, %v2197
    %v2199 = vpop.f32.mrf.mxu0
    %2200 = vdwg.mxu0
    %2201 = vmatpush.bf16.msra.mxu0 %v1317
    %2202 = vmatpush.bf16.msra.mxu0 %v1311
    %2203 = vmatpush.bf16.msra.mxu0 %v1305
    %2204 = vmatpush.bf16.msra.mxu0 %v1299
    %2205 = vmatpush.bf16.msra.mxu0 %v1293
    %2206 = vmatpush.bf16.msra.mxu0 %v1287
    %2207 = vmatpush.bf16.msra.mxu0 %v1281
    %2208 = vmatpush.bf16.msra.mxu0 %v1275
    %2209 = vmatmul.bf16.gmra.mxu0 %v51
    %v2210 = vpop.f32.mrf.mxu0
    %v2211 = vadd.f32 %v2198, %v2210
    %v2212 = vpop.f32.mrf.mxu0
    %2213 = vdwg.mxu0
    %2214 = vmatpush.bf16.msra.mxu0 %v1365
    %2215 = vmatpush.bf16.msra.mxu0 %v1359
    %2216 = vmatpush.bf16.msra.mxu0 %v1353
    %2217 = vmatpush.bf16.msra.mxu0 %v1347
    %2218 = vmatpush.bf16.msra.mxu0 %v1341
    %2219 = vmatpush.bf16.msra.mxu0 %v1335
    %2220 = vmatpush.bf16.msra.mxu0 %v1329
    %2221 = vmatpush.bf16.msra.mxu0 %v1323
    %2222 = vmatmul.bf16.gmra.mxu0 %v52
    %v2223 = vpop.f32.mrf.mxu0
    %v2224 = vadd.f32 %v2211, %v2223
    %v2225 = vpop.f32.mrf.mxu0
    %2226 = vdwg.mxu0
    %2227 = vmatpush.bf16.msra.mxu0 %v1413
    %2228 = vmatpush.bf16.msra.mxu0 %v1407
    %2229 = vmatpush.bf16.msra.mxu0 %v1401
    %2230 = vmatpush.bf16.msra.mxu0 %v1395
    %2231 = vmatpush.bf16.msra.mxu0 %v1389
    %2232 = vmatpush.bf16.msra.mxu0 %v1383
    %2233 = vmatpush.bf16.msra.mxu0 %v1377
    %2234 = vmatpush.bf16.msra.mxu0 %v1371
    %2235 = vmatmul.bf16.gmra.mxu0 %v53
    %v2236 = vpop.f32.mrf.mxu0
    %v2237 = vadd.f32 %v2224, %v2236
    %v2238 = vpop.f32.mrf.mxu0
    %2239 = vdwg.mxu0
    %2240 = vmatpush.bf16.msra.mxu0 %v1461
    %2241 = vmatpush.bf16.msra.mxu0 %v1455
    %2242 = vmatpush.bf16.msra.mxu0 %v1449
    %2243 = vmatpush.bf16.msra.mxu0 %v1443
    %2244 = vmatpush.bf16.msra.mxu0 %v1437
    %2245 = vmatpush.bf16.msra.mxu0 %v1431
    %2246 = vmatpush.bf16.msra.mxu0 %v1425
    %2247 = vmatpush.bf16.msra.mxu0 %v1419
    %2248 = vmatmul.bf16.gmra.mxu0 %v54
    %v2249 = vpop.f32.mrf.mxu0
    %v2250 = vadd.f32 %v2237, %v2249
    %v2251 = vpop.f32.mrf.mxu0
    %2252 = vdwg.mxu0
    %2253 = vmatpush.bf16.msra.mxu0 %v1509
    %2254 = vmatpush.bf16.msra.mxu0 %v1503
    %2255 = vmatpush.bf16.msra.mxu0 %v1497
    %2256 = vmatpush.bf16.msra.mxu0 %v1491
    %2257 = vmatpush.bf16.msra.mxu0 %v1485
    %2258 = vmatpush.bf16.msra.mxu0 %v1479
    %2259 = vmatpush.bf16.msra.mxu0 %v1473
    %2260 = vmatpush.bf16.msra.mxu0 %v1467
    %2261 = vmatmul.bf16.gmra.mxu0 %v55
    %v2262 = vpop.f32.mrf.mxu0
    %v2263 = vadd.f32 %v2250, %v2262
    %v2264 = vpop.f32.mrf.mxu0
    %2265 = vdwg.mxu0
    %2266 = vst [vmem:[%s3] sm:$0xff] %v1873
    %2267 = vst [vmem:[%s3 + $0x8] sm:$0xff] %v1951
    %2268 = vst [vmem:[%s3 + $0x10] sm:$0xff] %v2029
    %2269 = vst [vmem:[%s3 + $0x18] sm:$0xff] %v2107
    %2270 = vst [vmem:[%s3 + $0x20] sm:$0xff] %v2185
    %2271 = vst [vmem:[%s3 + $0x28] sm:$0xff] %v2263
    // Predicated region
    $region22: #{pca_forward.1} parent=1 // pred_check
      _
    $region23: #{pca_forward.1} parent=1 // pred_check_branch
      %2273 = sbr.rel (0) target = $region25
    $region24: #{pca_forward.1} parent=1 // pred_region
      _
    $region25: #{pca_forward.1} parent=1 // pred_fallthru
      _
    // Predicated region
    $region26: #{pca_forward.1} parent=1 // pred_check
      _
    $region27: #{pca_forward.1} parent=1 // pred_check_branch
      %2275 = sbr.rel (0) target = $region29
    $region28: #{pca_forward.1} parent=1 // pred_region
      _
    $region29: #{pca_forward.1} parent=1 // pred_fallthru
      _
    %2276 = vsyncpa [#allocation3], 1
    %2277 = vsyncpa [#allocation5], 1

</llo_original>
